<compile_context>
chip_gen: v7x
topology: tpu7x:2x2x1
jax: 0.10.0
libtpu: 0.0.40
codegen_flags: <defaults>
</compile_context>

<pallas_src>
import functools

import jax
import jax.numpy as jnp
from jax import lax
from jax.experimental import pallas as pl
from jax.experimental.pallas import tpu as pltpu

_LANES = 128
_OUT_SUBLANES = 8


def _round_up(x, m):
    return ((x + m - 1) // m) * m


# ---------------------------------------------------------------------------
# Pallas kernel: one (BN tile, S chunk) grid step.
# ---------------------------------------------------------------------------
def lstm_disc_kernel(x_ref,      # (SC, F, TBN)  bf16  time-major, BN on lanes
                     wx_ref,     # (4H, F)       bf16  folded W_ih @ W_emb
                     bx_ref,     # (4H, 1)       f32   folded bias
                     whh_ref,    # (4H, H)       bf16  recurrent weight
                     wfc1_ref,   # (M, H)        f32
                     bfc1_ref,   # (M, 1)        f32
                     wfc2_ref,   # (8, M)        f32   (row-replicated)
                     bfc2_ref,   # (8, 1)        f32
                     out_ref,    # (8, TBN)      f32   lane-dense output tile
                     xg_scr,     # (SC, 4H, TBN) bf16  precomputed input gates
                     h_scr,      # (H, TBN)      f32   carried hidden state
                     c_scr,      # (H, TBN)      f32   carried cell state
                     *, seq_len):
    sc_idx = pl.program_id(1)
    n_chunks = pl.num_programs(1)
    SC, F, TBN = x_ref.shape
    G, H = whh_ref.shape                 # G = 4H, gate order [i, f, g, o]
    need_mask = (seq_len % SC) != 0      # static: padded timesteps exist?

    # ---- init carried recurrent state on the first S chunk of each BN tile ----
    @pl.when(sc_idx == 0)
    def _():
        h_scr[...] = jnp.zeros_like(h_scr)
        c_scr[...] = jnp.zeros_like(c_scr)

    # ---- precompute input gates for every timestep of this chunk (MXU work
    #      off the serial path); bias added once; stored in bf16 scratch ----
    wx = wx_ref[...]
    bx = bx_ref[...]

    def pre(t, carry):
        g = jnp.dot(wx, x_ref[t], preferred_element_type=jnp.float32) + bx
        xg_scr[t] = g.astype(xg_scr.dtype)
        return carry

    lax.fori_loop(0, SC, pre, 0, unroll=min(SC, 8))

    # ---- serial recurrence: one bf16 (4H,H)@(H,TBN) MXU pass + full-width
    #      VPU/EUP gate math per timestep; gate splits are sublane slices ----
    whh = whh_ref[...]

    def step(t, carry):
        h, c = carry
        gates = jnp.dot(whh, h.astype(jnp.bfloat16),
                        preferred_element_type=jnp.float32)
        gates = gates + xg_scr[t].astype(jnp.float32)
        i_g = jax.nn.sigmoid(gates[0 * H:1 * H, :])
        f_g = jax.nn.sigmoid(gates[1 * H:2 * H, :])
        g_g = jnp.tanh(gates[2 * H:3 * H, :])
        o_g = jax.nn.sigmoid(gates[3 * H:4 * H, :])
        c_new = f_g * c + i_g * g_g
        h_new = o_g * jnp.tanh(c_new)
        if need_mask:
            # Skip state updates for zero-padded timesteps of the last chunk.
            m = ((sc_idx * SC + t) < seq_len).astype(jnp.float32)
            h_new = m * h_new + (1.0 - m) * h
            c_new = m * c_new + (1.0 - m) * c
        return h_new, c_new

    h, c = lax.fori_loop(0, SC, step, (h_scr[...], c_scr[...]),
                         unroll=min(SC, 8))
    h_scr[...] = h
    c_scr[...] = c

    # ---- MLP head after the last S chunk; full (8, TBN) unmasked store ----
    @pl.when(sc_idx == n_chunks - 1)
    def _():
        hid = jnp.dot(wfc1_ref[...], h, preferred_element_type=jnp.float32)
        hid = jnp.maximum(hid + bfc1_ref[...], 0.0)
        out_ref[...] = (jnp.dot(wfc2_ref[...], hid,
                                preferred_element_type=jnp.float32)
                        + bfc2_ref[...])


# ---------------------------------------------------------------------------
# Wrapper: weight folding, tiling heuristics, pallas_call.
# ---------------------------------------------------------------------------
def lstm_discriminator_forward(x, torch_params, *, tile_bn=None, s_chunk=None):
    """x: (batch, seq, node, feat) float32 -> (batch, node) float32."""
    batch, seq_len, node_num, feat = x.shape
    BN = batch * node_num

    (w_emb, b_emb, w_ih, w_hh, b_ih, b_hh, w_fc1, b_fc1, w_fc2, b_fc2) = torch_params
    H = w_hh.shape[1]
    M = w_fc1.shape[0]
    G = 4 * H

    # Fold spatial_embedding into the LSTM input projection (valid: no
    # activation between the Linear embedding and the LSTM in the module).
    Wx = (w_ih @ w_emb).astype(jnp.bfloat16)                             # (4H, F)
    bx = (w_ih @ b_emb + b_ih + b_hh).reshape(G, 1).astype(jnp.float32)  # (4H, 1)
    Whh = w_hh.astype(jnp.bfloat16)                                      # (4H, H)
    Wfc1 = w_fc1.astype(jnp.float32)                                     # (M, H)
    bfc1 = b_fc1.reshape(M, 1).astype(jnp.float32)                       # (M, 1)
    Wfc2 = jnp.tile(w_fc2.astype(jnp.float32), (_OUT_SUBLANES, 1))       # (8, M)
    bfc2 = jnp.tile(b_fc2.reshape(1, 1).astype(jnp.float32), (_OUT_SUBLANES, 1))

    # S chunk: bounds VMEM independent of seq_len (v7x: 64 MiB / TC).
    if s_chunk is None:
        s_chunk = min(seq_len, 64)
    s_chunk = max(1, min(s_chunk, seq_len))
    S_pad = _round_up(seq_len, s_chunk)

    # BN tile: multiple of 128 so the BN axis is lane-dense; size bounded by a
    # VMEM formula that includes the bf16 gate scratch and bf16 x double-buffer.
    if tile_bn is None:
        tile_bn = 2 * _LANES if BN > 4 * _LANES else _LANES
        per_row_bytes = (2 * s_chunk * feat * 2        # double-buffered bf16 x
                         + s_chunk * G * 2             # bf16 input-gate scratch
                         + 2 * H * 4                   # f32 h / c carry
                         + 2 * _OUT_SUBLANES * 4)      # double-buffered f32 out
        budget = 40 * 1024 * 1024                      # safe for v7x (64 MiB/TC)
        while tile_bn > _LANES and tile_bn * per_row_bytes > budget:
            tile_bn -= _LANES
    tile_bn = max(_LANES, _round_up(tile_bn, _LANES))
    BN_pad = _round_up(BN, tile_bn)

    # (B, S, N, F) -> (S, F, B*N): time-major, BN on the last (lane) axis,
    # BN index = b*node + n (matches the PyTorch permute/reshape ordering).
    x_t = jnp.transpose(x, (1, 3, 0, 2)).reshape(seq_len, feat, BN)
    x_t = jnp.pad(x_t, ((0, S_pad - seq_len), (0, 0), (0, BN_pad - BN)))
    x_t = x_t.astype(jnp.bfloat16)

    num_bn_tiles = BN_pad // tile_bn
    num_s_chunks = S_pad // s_chunk

    kernel = functools.partial(lstm_disc_kernel, seq_len=seq_len)

    out = pl.pallas_call(
        kernel,
        out_shape=jax.ShapeDtypeStruct((_OUT_SUBLANES, BN_pad), jnp.float32),
        grid=(num_bn_tiles, num_s_chunks),
        in_specs=[
            pl.BlockSpec((s_chunk, feat, tile_bn), lambda i, j: (j, 0, i)),
            pl.BlockSpec((G, feat), lambda i, j: (0, 0)),
            pl.BlockSpec((G, 1), lambda i, j: (0, 0)),
            pl.BlockSpec((G, H), lambda i, j: (0, 0)),
            pl.BlockSpec((M, H), lambda i, j: (0, 0)),
            pl.BlockSpec((M, 1), lambda i, j: (0, 0)),
            pl.BlockSpec((_OUT_SUBLANES, M), lambda i, j: (0, 0)),
            pl.BlockSpec((_OUT_SUBLANES, 1), lambda i, j: (0, 0)),
        ],
        out_specs=pl.BlockSpec((_OUT_SUBLANES, tile_bn), lambda i, j: (0, i)),
        scratch_shapes=[
            pltpu.VMEM((s_chunk, G, tile_bn), jnp.bfloat16),   # input gates
            pltpu.VMEM((H, tile_bn), jnp.float32),             # h carry
            pltpu.VMEM((H, tile_bn), jnp.float32),             # c carry
        ],
        compiler_params=pltpu.CompilerParams(
            dimension_semantics=("parallel", "arbitrary"),
            vmem_limit_bytes=48 * 1024 * 1024,
        ),
    )(x_t, Wx, bx, Whh, Wfc1, bfc1, Wfc2, bfc2)

    return out[0, :BN].reshape(batch, node_num)


# ---------------------------------------------------------------------------
# Deterministic PyTorch-shaped parameter initialization.
# ---------------------------------------------------------------------------
def init_params(key, input_size, embedding_size, hidden_size, mlp_size):
    ks = jax.random.split(key, 10)
    s = 0.1
    w_emb = jax.random.normal(ks[0], (embedding_size, input_size), jnp.float32) * s
    b_emb = jax.random.normal(ks[1], (embedding_size,), jnp.float32) * s
    w_ih = jax.random.normal(ks[2], (4 * hidden_size, embedding_size), jnp.float32) * s
    w_hh = jax.random.normal(ks[3], (4 * hidden_size, hidden_size), jnp.float32) * s
    b_ih = jax.random.normal(ks[4], (4 * hidden_size,), jnp.float32) * s
    b_hh = jax.random.normal(ks[5], (4 * hidden_size,), jnp.float32) * s
    w_fc1 = jax.random.normal(ks[6], (mlp_size, hidden_size), jnp.float32) * s
    b_fc1 = jax.random.normal(ks[7], (mlp_size,), jnp.float32) * s
    w_fc2 = jax.random.normal(ks[8], (1, mlp_size), jnp.float32) * s
    b_fc2 = jax.random.normal(ks[9], (1,), jnp.float32) * s
    return (w_emb, b_emb, w_ih, w_hh, b_ih, b_hh, w_fc1, b_fc1, w_fc2, b_fc2)


# ---------------------------------------------------------------------------
# Pure-JAX reference (mirrors the PyTorch forward, unfused, full f32).
# ---------------------------------------------------------------------------
def reference_forward(x, torch_params):
    (w_emb, b_emb, w_ih, w_hh, b_ih, b_hh, w_fc1, b_fc1, w_fc2, b_fc2) = torch_params
    batch, seq_len, node_num, feat = x.shape
    H = w_hh.shape[1]
    xr = jnp.transpose(x, (0, 2, 1, 3)).reshape(batch * node_num, seq_len, feat)
    xe = xr @ w_emb.T + b_emb                                  # (BN, S, E)
    h = jnp.zeros((batch * node_num, H), jnp.float32)
    c = jnp.zeros_like(h)
    for t in range(seq_len):
        gates = xe[:, t, :] @ w_ih.T + h @ w_hh.T + b_ih + b_hh
        i_g = jax.nn.sigmoid(gates[:, 0:H])
        f_g = jax.nn.sigmoid(gates[:, H:2 * H])
        g_g = jnp.tanh(gates[:, 2 * H:3 * H])
        o_g = jax.nn.sigmoid(gates[:, 3 * H:4 * H])
        c = f_g * c + i_g * g_g
        h = o_g * jnp.tanh(c)
    out = jnp.maximum(h @ w_fc1.T + b_fc1, 0.0) @ w_fc2.T + b_fc2
    return out.reshape(batch, node_num)


if __name__ == "__main__":
    batch, seq_len, node_num, input_size = 2, 8, 16, 16
    embedding_size, hidden_size, mlp_size = 32, 32, 128

    key = jax.random.PRNGKey(0)
    k_x, k_p = jax.random.split(key)
    x = jax.random.normal(k_x, (batch, seq_len, node_num, input_size), jnp.float32)
    params = init_params(k_p, input_size, embedding_size, hidden_size, mlp_size)

    # s_chunk=3 -> 3 S-chunks (with one padded timestep), exercising the
    # carried-h/c "arbitrary" grid axis and the tail-masking path.
    out = lstm_discriminator_forward(x, params, s_chunk=3)
    out = jax.block_until_ready(out)

    ref = jax.block_until_ready(reference_forward(x, params))
    assert out.shape == (batch, node_num)
    # Tolerance accounts for bf16 on x / folded input weights / Whh / gate
    # scratch; recurrence state and all accumulation stay f32.
    assert jnp.allclose(out, ref, rtol=2e-2, atol=2e-2), (out, ref)

    print("KERNEL_OK")
</pallas_src>

<mosaic_0001>
module attributes {stable_mosaic.version = 11 : i64} {
  func.func @lstm_disc_kernel(%arg0: i32, %arg1: i32, %arg2: memref<3x16x128xbf16, #tpu.memory_space<vmem>>, %arg3: memref<128x16xbf16, #tpu.memory_space<vmem>>, %arg4: memref<128x1xf32, #tpu.memory_space<vmem>>, %arg5: memref<128x32xbf16, #tpu.memory_space<vmem>>, %arg6: memref<128x32xf32, #tpu.memory_space<vmem>>, %arg7: memref<128x1xf32, #tpu.memory_space<vmem>>, %arg8: memref<8x128xf32, #tpu.memory_space<vmem>>, %arg9: memref<8x1xf32, #tpu.memory_space<vmem>>, %arg10: memref<8x128xf32, #tpu.memory_space<vmem>>, %arg11: memref<3x128x128xbf16, #tpu.memory_space<vmem>>, %arg12: memref<32x128xf32, #tpu.memory_space<vmem>>, %arg13: memref<32x128xf32, #tpu.memory_space<vmem>>) attributes {dimension_semantics = [#tpu.dimension_semantics<parallel>, #tpu.dimension_semantics<arbitrary>], iteration_bounds = array<i64: 1, 3>, scalar_prefetch = 0 : i64, scratch_operands = 3 : i64, tpu.core_type = #tpu.core_type<tc>, window_params = [{transform_indices = @transform_0, window_bounds = array<i64: 3, 16, 128>}, {pipeline_mode = #tpu.pipeline_mode<synchronous>, transform_indices = @transform_1, window_bounds = array<i64: 128, 16>}, {pipeline_mode = #tpu.pipeline_mode<synchronous>, transform_indices = @transform_2, window_bounds = array<i64: 128, 1>}, {pipeline_mode = #tpu.pipeline_mode<synchronous>, transform_indices = @transform_3, window_bounds = array<i64: 128, 32>}, {pipeline_mode = #tpu.pipeline_mode<synchronous>, transform_indices = @transform_4, window_bounds = array<i64: 128, 32>}, {pipeline_mode = #tpu.pipeline_mode<synchronous>, transform_indices = @transform_5, window_bounds = array<i64: 128, 1>}, {pipeline_mode = #tpu.pipeline_mode<synchronous>, transform_indices = @transform_6, window_bounds = array<i64: 8, 128>}, {pipeline_mode = #tpu.pipeline_mode<synchronous>, transform_indices = @transform_7, window_bounds = array<i64: 8, 1>}, {transform_indices = @transform_8, window_bounds = array<i64: 8, 128>}]} {
    %c0_i32 = arith.constant 0 : i32
    %0 = arith.cmpi eq, %arg1, %c0_i32 : i32
    %1 = arith.extui %0 : i1 to i32
    %c0_i32_0 = arith.constant 0 : i32
    %2 = arith.cmpi ne, %1, %c0_i32_0 : i32
    scf.if %2 {
      %cst_64 = arith.constant 0.000000e+00 : f32
      %193 = vector.broadcast %cst_64 : f32 to vector<32x128xf32>
      %c0_65 = arith.constant 0 : index
      %c0_66 = arith.constant 0 : index
      %194 = vector.load %arg12[%c0_65, %c0_66] : memref<32x128xf32, #tpu.memory_space<vmem>>, vector<32x128xf32>
      tpu.vector_store %arg12[%c0_65, %c0_66], %193 {strides = array<i32>} : memref<32x128xf32, #tpu.memory_space<vmem>>, vector<32x128xf32>,
      %cst_67 = arith.constant 0.000000e+00 : f32
      %195 = vector.broadcast %cst_67 : f32 to vector<32x128xf32>
      %c0_68 = arith.constant 0 : index
      %c0_69 = arith.constant 0 : index
      %196 = vector.load %arg13[%c0_68, %c0_69] : memref<32x128xf32, #tpu.memory_space<vmem>>, vector<32x128xf32>
      tpu.vector_store %arg13[%c0_68, %c0_69], %195 {strides = array<i32>} : memref<32x128xf32, #tpu.memory_space<vmem>>, vector<32x128xf32>,
    } else {
    }
    %c0 = arith.constant 0 : index
    %c0_1 = arith.constant 0 : index
    %3 = vector.load %arg3[%c0, %c0_1] : memref<128x16xbf16, #tpu.memory_space<vmem>>, vector<128x16xbf16>
    %c0_2 = arith.constant 0 : index
    %c0_3 = arith.constant 0 : index
    %4 = vector.load %arg4[%c0_2, %c0_3] : memref<128x1xf32, #tpu.memory_space<vmem>>, vector<128x1xf32>
    %c0_i32_4 = arith.constant 0 : i32
    %5 = arith.index_cast %c0_i32_4 : i32 to index
    %c0_5 = arith.constant 0 : index
    %c0_6 = arith.constant 0 : index
    %6 = vector.load %arg2[%5, %c0_5, %c0_6] : memref<3x16x128xbf16, #tpu.memory_space<vmem>>, vector<1x16x128xbf16>
    %7 = vector.shape_cast %6 : vector<1x16x128xbf16> to vector<16x128xbf16>
    %cst = arith.constant dense<0.000000e+00> : vector<128x128xf32>
    %8 = tpu.matmul %3, %7, %cst {dimension_numbers = #tpu.dot_dimension_numbers<[1], [0], [0], [1], [0, 0, 1, 1], [], []>} : vector<128x16xbf16>, vector<16x128xbf16>, vector<128x128xf32> -> vector<128x128xf32>
    %9 = vector.broadcast %4 : vector<128x1xf32> to vector<128x128xf32>
    %10 = arith.addf %8, %9 : vector<128x128xf32>
    %11 = arith.truncf %10 : vector<128x128xf32> to vector<128x128xbf16>
    %12 = arith.index_cast %c0_i32_4 : i32 to index
    %c0_7 = arith.constant 0 : index
    %c0_8 = arith.constant 0 : index
    %13 = vector.load %arg11[%12, %c0_7, %c0_8] : memref<3x128x128xbf16, #tpu.memory_space<vmem>>, vector<1x128x128xbf16>
    %14 = vector.shape_cast %13 : vector<1x128x128xbf16> to vector<128x128xbf16>
    %15 = vector.shape_cast %11 : vector<128x128xbf16> to vector<1x128x128xbf16>
    tpu.vector_store %arg11[%12, %c0_7, %c0_8], %15 {strides = array<i32>} : memref<3x128x128xbf16, #tpu.memory_space<vmem>>, vector<1x128x128xbf16>,
    %c1_i32 = arith.constant 1 : i32
    %16 = arith.index_cast %c1_i32 : i32 to index
    %c0_9 = arith.constant 0 : index
    %c0_10 = arith.constant 0 : index
    %17 = vector.load %arg2[%16, %c0_9, %c0_10] : memref<3x16x128xbf16, #tpu.memory_space<vmem>>, vector<1x16x128xbf16>
    %18 = vector.shape_cast %17 : vector<1x16x128xbf16> to vector<16x128xbf16>
    %cst_11 = arith.constant dense<0.000000e+00> : vector<128x128xf32>
    %19 = tpu.matmul %3, %18, %cst_11 {dimension_numbers = #tpu.dot_dimension_numbers<[1], [0], [0], [1], [0, 0, 1, 1], [], []>} : vector<128x16xbf16>, vector<16x128xbf16>, vector<128x128xf32> -> vector<128x128xf32>
    %20 = vector.broadcast %4 : vector<128x1xf32> to vector<128x128xf32>
    %21 = arith.addf %19, %20 : vector<128x128xf32>
    %22 = arith.truncf %21 : vector<128x128xf32> to vector<128x128xbf16>
    %23 = arith.index_cast %c1_i32 : i32 to index
    %c0_12 = arith.constant 0 : index
    %c0_13 = arith.constant 0 : index
    %24 = vector.load %arg11[%23, %c0_12, %c0_13] : memref<3x128x128xbf16, #tpu.memory_space<vmem>>, vector<1x128x128xbf16>
    %25 = vector.shape_cast %24 : vector<1x128x128xbf16> to vector<128x128xbf16>
    %26 = vector.shape_cast %22 : vector<128x128xbf16> to vector<1x128x128xbf16>
    tpu.vector_store %arg11[%23, %c0_12, %c0_13], %26 {strides = array<i32>} : memref<3x128x128xbf16, #tpu.memory_space<vmem>>, vector<1x128x128xbf16>,
    %c2_i32 = arith.constant 2 : i32
    %27 = arith.index_cast %c2_i32 : i32 to index
    %c0_14 = arith.constant 0 : index
    %c0_15 = arith.constant 0 : index
    %28 = vector.load %arg2[%27, %c0_14, %c0_15] : memref<3x16x128xbf16, #tpu.memory_space<vmem>>, vector<1x16x128xbf16>
    %29 = vector.shape_cast %28 : vector<1x16x128xbf16> to vector<16x128xbf16>
    %cst_16 = arith.constant dense<0.000000e+00> : vector<128x128xf32>
    %30 = tpu.matmul %3, %29, %cst_16 {dimension_numbers = #tpu.dot_dimension_numbers<[1], [0], [0], [1], [0, 0, 1, 1], [], []>} : vector<128x16xbf16>, vector<16x128xbf16>, vector<128x128xf32> -> vector<128x128xf32>
    %31 = vector.broadcast %4 : vector<128x1xf32> to vector<128x128xf32>
    %32 = arith.addf %30, %31 : vector<128x128xf32>
    %33 = arith.truncf %32 : vector<128x128xf32> to vector<128x128xbf16>
    %34 = arith.index_cast %c2_i32 : i32 to index
    %c0_17 = arith.constant 0 : index
    %c0_18 = arith.constant 0 : index
    %35 = vector.load %arg11[%34, %c0_17, %c0_18] : memref<3x128x128xbf16, #tpu.memory_space<vmem>>, vector<1x128x128xbf16>
    %36 = vector.shape_cast %35 : vector<1x128x128xbf16> to vector<128x128xbf16>
    %37 = vector.shape_cast %33 : vector<128x128xbf16> to vector<1x128x128xbf16>
    tpu.vector_store %arg11[%34, %c0_17, %c0_18], %37 {strides = array<i32>} : memref<3x128x128xbf16, #tpu.memory_space<vmem>>, vector<1x128x128xbf16>,
    %c3_i32 = arith.constant 3 : i32
    %c0_19 = arith.constant 0 : index
    %c0_20 = arith.constant 0 : index
    %38 = vector.load %arg5[%c0_19, %c0_20] : memref<128x32xbf16, #tpu.memory_space<vmem>>, vector<128x32xbf16>
    %c0_21 = arith.constant 0 : index
    %c0_22 = arith.constant 0 : index
    %39 = vector.load %arg12[%c0_21, %c0_22] : memref<32x128xf32, #tpu.memory_space<vmem>>, vector<32x128xf32>
    %c0_23 = arith.constant 0 : index
    %c0_24 = arith.constant 0 : index
    %40 = vector.load %arg13[%c0_23, %c0_24] : memref<32x128xf32, #tpu.memory_space<vmem>>, vector<32x128xf32>
    %c0_i32_25 = arith.constant 0 : i32
    %41 = arith.truncf %39 : vector<32x128xf32> to vector<32x128xbf16>
    %cst_26 = arith.constant dense<0.000000e+00> : vector<128x128xf32>
    %42 = tpu.matmul %38, %41, %cst_26 {dimension_numbers = #tpu.dot_dimension_numbers<[1], [0], [0], [1], [0, 0, 1, 1], [], []>} : vector<128x32xbf16>, vector<32x128xbf16>, vector<128x128xf32> -> vector<128x128xf32>
    %43 = arith.index_cast %c0_i32_25 : i32 to index
    %c0_27 = arith.constant 0 : index
    %c0_28 = arith.constant 0 : index
    %44 = vector.load %arg11[%43, %c0_27, %c0_28] : memref<3x128x128xbf16, #tpu.memory_space<vmem>>, vector<1x128x128xbf16>
    %45 = vector.shape_cast %44 : vector<1x128x128xbf16> to vector<128x128xbf16>
    %46 = arith.extf %45 : vector<128x128xbf16> to vector<128x128xf32>
    %47 = arith.addf %42, %46 : vector<128x128xf32>
    %48 = vector.extract_strided_slice %47 {offsets = [0, 0], sizes = [32, 128], strides = [1, 1]} : vector<128x128xf32> to vector<32x128xf32>
    %49 = arith.negf %48 : vector<32x128xf32>
    %50 = math.exp %49 : vector<32x128xf32>
    %cst_29 = arith.constant 1.000000e+00 : f32
    %51 = vector.broadcast %cst_29 : f32 to vector<32x128xf32>
    %52 = arith.addf %51, %50 : vector<32x128xf32>
    %53 = arith.divf %51, %52 : vector<32x128xf32>
    %54 = vector.extract_strided_slice %47 {offsets = [32, 0], sizes = [32, 128], strides = [1, 1]} : vector<128x128xf32> to vector<32x128xf32>
    %55 = arith.negf %54 : vector<32x128xf32>
    %56 = math.exp %55 : vector<32x128xf32>
    %cst_30 = arith.constant 1.000000e+00 : f32
    %57 = vector.broadcast %cst_30 : f32 to vector<32x128xf32>
    %58 = arith.addf %57, %56 : vector<32x128xf32>
    %59 = arith.divf %57, %58 : vector<32x128xf32>
    %60 = vector.extract_strided_slice %47 {offsets = [64, 0], sizes = [32, 128], strides = [1, 1]} : vector<128x128xf32> to vector<32x128xf32>
    %61 = math.tanh %60 : vector<32x128xf32>
    %62 = vector.extract_strided_slice %47 {offsets = [96, 0], sizes = [32, 128], strides = [1, 1]} : vector<128x128xf32> to vector<32x128xf32>
    %63 = arith.negf %62 : vector<32x128xf32>
    %64 = math.exp %63 : vector<32x128xf32>
    %cst_31 = arith.constant 1.000000e+00 : f32
    %65 = vector.broadcast %cst_31 : f32 to vector<32x128xf32>
    %66 = arith.addf %65, %64 : vector<32x128xf32>
    %67 = arith.divf %65, %66 : vector<32x128xf32>
    %68 = arith.mulf %59, %40 : vector<32x128xf32>
    %69 = arith.mulf %53, %61 : vector<32x128xf32>
    %70 = arith.addf %68, %69 : vector<32x128xf32>
    %71 = math.tanh %70 : vector<32x128xf32>
    %72 = arith.mulf %67, %71 : vector<32x128xf32>
    %c3_i32_32 = arith.constant 3 : i32
    %73 = arith.muli %arg1, %c3_i32_32 : i32
    %74 = arith.addi %73, %c0_i32_25 : i32
    %c8_i32 = arith.constant 8 : i32
    %75 = arith.cmpi slt, %74, %c8_i32 : i32
    %76 = arith.extui %75 : i1 to i32
    %77 = arith.sitofp %76 : i32 to f32
    %78 = vector.broadcast %77 : f32 to vector<32x128xf32>
    %79 = arith.mulf %78, %72 : vector<32x128xf32>
    %cst_33 = arith.constant 1.000000e+00 : f32
    %80 = arith.subf %cst_33, %77 : f32
    %81 = vector.broadcast %80 : f32 to vector<32x128xf32>
    %82 = arith.mulf %81, %39 : vector<32x128xf32>
    %83 = arith.addf %79, %82 : vector<32x128xf32>
    %84 = vector.broadcast %77 : f32 to vector<32x128xf32>
    %85 = arith.mulf %84, %70 : vector<32x128xf32>
    %cst_34 = arith.constant 1.000000e+00 : f32
    %86 = arith.subf %cst_34, %77 : f32
    %87 = vector.broadcast %86 : f32 to vector<32x128xf32>
    %88 = arith.mulf %87, %40 : vector<32x128xf32>
    %89 = arith.addf %85, %88 : vector<32x128xf32>
    %c1_i32_35 = arith.constant 1 : i32
    %90 = arith.truncf %83 : vector<32x128xf32> to vector<32x128xbf16>
    %cst_36 = arith.constant dense<0.000000e+00> : vector<128x128xf32>
    %91 = tpu.matmul %38, %90, %cst_36 {dimension_numbers = #tpu.dot_dimension_numbers<[1], [0], [0], [1], [0, 0, 1, 1], [], []>} : vector<128x32xbf16>, vector<32x128xbf16>, vector<128x128xf32> -> vector<128x128xf32>
    %92 = arith.index_cast %c1_i32_35 : i32 to index
    %c0_37 = arith.constant 0 : index
    %c0_38 = arith.constant 0 : index
    %93 = vector.load %arg11[%92, %c0_37, %c0_38] : memref<3x128x128xbf16, #tpu.memory_space<vmem>>, vector<1x128x128xbf16>
    %94 = vector.shape_cast %93 : vector<1x128x128xbf16> to vector<128x128xbf16>
    %95 = arith.extf %94 : vector<128x128xbf16> to vector<128x128xf32>
    %96 = arith.addf %91, %95 : vector<128x128xf32>
    %97 = vector.extract_strided_slice %96 {offsets = [0, 0], sizes = [32, 128], strides = [1, 1]} : vector<128x128xf32> to vector<32x128xf32>
    %98 = arith.negf %97 : vector<32x128xf32>
    %99 = math.exp %98 : vector<32x128xf32>
    %cst_39 = arith.constant 1.000000e+00 : f32
    %100 = vector.broadcast %cst_39 : f32 to vector<32x128xf32>
    %101 = arith.addf %100, %99 : vector<32x128xf32>
    %102 = arith.divf %100, %101 : vector<32x128xf32>
    %103 = vector.extract_strided_slice %96 {offsets = [32, 0], sizes = [32, 128], strides = [1, 1]} : vector<128x128xf32> to vector<32x128xf32>
    %104 = arith.negf %103 : vector<32x128xf32>
    %105 = math.exp %104 : vector<32x128xf32>
    %cst_40 = arith.constant 1.000000e+00 : f32
    %106 = vector.broadcast %cst_40 : f32 to vector<32x128xf32>
    %107 = arith.addf %106, %105 : vector<32x128xf32>
    %108 = arith.divf %106, %107 : vector<32x128xf32>
    %109 = vector.extract_strided_slice %96 {offsets = [64, 0], sizes = [32, 128], strides = [1, 1]} : vector<128x128xf32> to vector<32x128xf32>
    %110 = math.tanh %109 : vector<32x128xf32>
    %111 = vector.extract_strided_slice %96 {offsets = [96, 0], sizes = [32, 128], strides = [1, 1]} : vector<128x128xf32> to vector<32x128xf32>
    %112 = arith.negf %111 : vector<32x128xf32>
    %113 = math.exp %112 : vector<32x128xf32>
    %cst_41 = arith.constant 1.000000e+00 : f32
    %114 = vector.broadcast %cst_41 : f32 to vector<32x128xf32>
    %115 = arith.addf %114, %113 : vector<32x128xf32>
    %116 = arith.divf %114, %115 : vector<32x128xf32>
    %117 = arith.mulf %108, %89 : vector<32x128xf32>
    %118 = arith.mulf %102, %110 : vector<32x128xf32>
    %119 = arith.addf %117, %118 : vector<32x128xf32>
    %120 = math.tanh %119 : vector<32x128xf32>
    %121 = arith.mulf %116, %120 : vector<32x128xf32>
    %c3_i32_42 = arith.constant 3 : i32
    %122 = arith.muli %arg1, %c3_i32_42 : i32
    %123 = arith.addi %122, %c1_i32_35 : i32
    %c8_i32_43 = arith.constant 8 : i32
    %124 = arith.cmpi slt, %123, %c8_i32_43 : i32
    %125 = arith.extui %124 : i1 to i32
    %126 = arith.sitofp %125 : i32 to f32
    %127 = vector.broadcast %126 : f32 to vector<32x128xf32>
    %128 = arith.mulf %127, %121 : vector<32x128xf32>
    %cst_44 = arith.constant 1.000000e+00 : f32
    %129 = arith.subf %cst_44, %126 : f32
    %130 = vector.broadcast %129 : f32 to vector<32x128xf32>
    %131 = arith.mulf %130, %83 : vector<32x128xf32>
    %132 = arith.addf %128, %131 : vector<32x128xf32>
    %133 = vector.broadcast %126 : f32 to vector<32x128xf32>
    %134 = arith.mulf %133, %119 : vector<32x128xf32>
    %cst_45 = arith.constant 1.000000e+00 : f32
    %135 = arith.subf %cst_45, %126 : f32
    %136 = vector.broadcast %135 : f32 to vector<32x128xf32>
    %137 = arith.mulf %136, %89 : vector<32x128xf32>
    %138 = arith.addf %134, %137 : vector<32x128xf32>
    %c2_i32_46 = arith.constant 2 : i32
    %139 = arith.truncf %132 : vector<32x128xf32> to vector<32x128xbf16>
    %cst_47 = arith.constant dense<0.000000e+00> : vector<128x128xf32>
    %140 = tpu.matmul %38, %139, %cst_47 {dimension_numbers = #tpu.dot_dimension_numbers<[1], [0], [0], [1], [0, 0, 1, 1], [], []>} : vector<128x32xbf16>, vector<32x128xbf16>, vector<128x128xf32> -> vector<128x128xf32>
    %141 = arith.index_cast %c2_i32_46 : i32 to index
    %c0_48 = arith.constant 0 : index
    %c0_49 = arith.constant 0 : index
    %142 = vector.load %arg11[%141, %c0_48, %c0_49] : memref<3x128x128xbf16, #tpu.memory_space<vmem>>, vector<1x128x128xbf16>
    %143 = vector.shape_cast %142 : vector<1x128x128xbf16> to vector<128x128xbf16>
    %144 = arith.extf %143 : vector<128x128xbf16> to vector<128x128xf32>
    %145 = arith.addf %140, %144 : vector<128x128xf32>
    %146 = vector.extract_strided_slice %145 {offsets = [0, 0], sizes = [32, 128], strides = [1, 1]} : vector<128x128xf32> to vector<32x128xf32>
    %147 = arith.negf %146 : vector<32x128xf32>
    %148 = math.exp %147 : vector<32x128xf32>
    %cst_50 = arith.constant 1.000000e+00 : f32
    %149 = vector.broadcast %cst_50 : f32 to vector<32x128xf32>
    %150 = arith.addf %149, %148 : vector<32x128xf32>
    %151 = arith.divf %149, %150 : vector<32x128xf32>
    %152 = vector.extract_strided_slice %145 {offsets = [32, 0], sizes = [32, 128], strides = [1, 1]} : vector<128x128xf32> to vector<32x128xf32>
    %153 = arith.negf %152 : vector<32x128xf32>
    %154 = math.exp %153 : vector<32x128xf32>
    %cst_51 = arith.constant 1.000000e+00 : f32
    %155 = vector.broadcast %cst_51 : f32 to vector<32x128xf32>
    %156 = arith.addf %155, %154 : vector<32x128xf32>
    %157 = arith.divf %155, %156 : vector<32x128xf32>
    %158 = vector.extract_strided_slice %145 {offsets = [64, 0], sizes = [32, 128], strides = [1, 1]} : vector<128x128xf32> to vector<32x128xf32>
    %159 = math.tanh %158 : vector<32x128xf32>
    %160 = vector.extract_strided_slice %145 {offsets = [96, 0], sizes = [32, 128], strides = [1, 1]} : vector<128x128xf32> to vector<32x128xf32>
    %161 = arith.negf %160 : vector<32x128xf32>
    %162 = math.exp %161 : vector<32x128xf32>
    %cst_52 = arith.constant 1.000000e+00 : f32
    %163 = vector.broadcast %cst_52 : f32 to vector<32x128xf32>
    %164 = arith.addf %163, %162 : vector<32x128xf32>
    %165 = arith.divf %163, %164 : vector<32x128xf32>
    %166 = arith.mulf %157, %138 : vector<32x128xf32>
    %167 = arith.mulf %151, %159 : vector<32x128xf32>
    %168 = arith.addf %166, %167 : vector<32x128xf32>
    %169 = math.tanh %168 : vector<32x128xf32>
    %170 = arith.mulf %165, %169 : vector<32x128xf32>
    %c3_i32_53 = arith.constant 3 : i32
    %171 = arith.muli %arg1, %c3_i32_53 : i32
    %172 = arith.addi %171, %c2_i32_46 : i32
    %c8_i32_54 = arith.constant 8 : i32
    %173 = arith.cmpi slt, %172, %c8_i32_54 : i32
    %174 = arith.extui %173 : i1 to i32
    %175 = arith.sitofp %174 : i32 to f32
    %176 = vector.broadcast %175 : f32 to vector<32x128xf32>
    %177 = arith.mulf %176, %170 : vector<32x128xf32>
    %cst_55 = arith.constant 1.000000e+00 : f32
    %178 = arith.subf %cst_55, %175 : f32
    %179 = vector.broadcast %178 : f32 to vector<32x128xf32>
    %180 = arith.mulf %179, %132 : vector<32x128xf32>
    %181 = arith.addf %177, %180 : vector<32x128xf32>
    %182 = vector.broadcast %175 : f32 to vector<32x128xf32>
    %183 = arith.mulf %182, %168 : vector<32x128xf32>
    %cst_56 = arith.constant 1.000000e+00 : f32
    %184 = arith.subf %cst_56, %175 : f32
    %185 = vector.broadcast %184 : f32 to vector<32x128xf32>
    %186 = arith.mulf %185, %138 : vector<32x128xf32>
    %187 = arith.addf %183, %186 : vector<32x128xf32>
    %c3_i32_57 = arith.constant 3 : i32
    %c0_58 = arith.constant 0 : index
    %c0_59 = arith.constant 0 : index
    %188 = vector.load %arg12[%c0_58, %c0_59] : memref<32x128xf32, #tpu.memory_space<vmem>>, vector<32x128xf32>
    tpu.vector_store %arg12[%c0_58, %c0_59], %181 {strides = array<i32>} : memref<32x128xf32, #tpu.memory_space<vmem>>, vector<32x128xf32>,
    %c0_60 = arith.constant 0 : index
    %c0_61 = arith.constant 0 : index
    %189 = vector.load %arg13[%c0_60, %c0_61] : memref<32x128xf32, #tpu.memory_space<vmem>>, vector<32x128xf32>
    tpu.vector_store %arg13[%c0_60, %c0_61], %187 {strides = array<i32>} : memref<32x128xf32, #tpu.memory_space<vmem>>, vector<32x128xf32>,
    %c2_i32_62 = arith.constant 2 : i32
    %190 = arith.cmpi eq, %arg1, %c2_i32_62 : i32
    %191 = arith.extui %190 : i1 to i32
    %c0_i32_63 = arith.constant 0 : i32
    %192 = arith.cmpi ne, %191, %c0_i32_63 : i32
    scf.if %192 {
      %c0_64 = arith.constant 0 : index
      %c0_65 = arith.constant 0 : index
      %193 = vector.load %arg6[%c0_64, %c0_65] : memref<128x32xf32, #tpu.memory_space<vmem>>, vector<128x32xf32>
      %cst_66 = arith.constant dense<0.000000e+00> : vector<128x128xf32>
      %194 = tpu.matmul %193, %181, %cst_66 {dimension_numbers = #tpu.dot_dimension_numbers<[1], [0], [0], [1], [0, 0, 1, 1], [], []>} : vector<128x32xf32>, vector<32x128xf32>, vector<128x128xf32> -> vector<128x128xf32>
      %c0_67 = arith.constant 0 : index
      %c0_68 = arith.constant 0 : index
      %195 = vector.load %arg7[%c0_67, %c0_68] : memref<128x1xf32, #tpu.memory_space<vmem>>, vector<128x1xf32>
      %196 = vector.broadcast %195 : vector<128x1xf32> to vector<128x128xf32>
      %197 = arith.addf %194, %196 : vector<128x128xf32>
      %cst_69 = arith.constant 0.000000e+00 : f32
      %198 = vector.broadcast %cst_69 : f32 to vector<128x128xf32>
      %199 = arith.maximumf %197, %198 : vector<128x128xf32>
      %c0_70 = arith.constant 0 : index
      %c0_71 = arith.constant 0 : index
      %200 = vector.load %arg8[%c0_70, %c0_71] : memref<8x128xf32, #tpu.memory_space<vmem>>, vector<8x128xf32>
      %cst_72 = arith.constant dense<0.000000e+00> : vector<8x128xf32>
      %201 = tpu.matmul %200, %199, %cst_72 {dimension_numbers = #tpu.dot_dimension_numbers<[1], [0], [0], [1], [0, 0, 1, 1], [], []>} : vector<8x128xf32>, vector<128x128xf32>, vector<8x128xf32> -> vector<8x128xf32>
      %c0_73 = arith.constant 0 : index
      %c0_74 = arith.constant 0 : index
      %202 = vector.load %arg9[%c0_73, %c0_74] : memref<8x1xf32, #tpu.memory_space<vmem>>, vector<8x1xf32>
      %203 = vector.broadcast %202 : vector<8x1xf32> to vector<8x128xf32>
      %204 = arith.addf %201, %203 : vector<8x128xf32>
      %c0_75 = arith.constant 0 : index
      %c0_76 = arith.constant 0 : index
      %205 = vector.load %arg10[%c0_75, %c0_76] : memref<8x128xf32, #tpu.memory_space<vmem>>, vector<8x128xf32>
      tpu.vector_store %arg10[%c0_75, %c0_76], %204 {strides = array<i32>} : memref<8x128xf32, #tpu.memory_space<vmem>>, vector<8x128xf32>,
    } else {
    }
    return
  }
  func.func @transform_0(%arg0: i32, %arg1: i32) -> (i32, i32, i32) {
    %c0_i32 = arith.constant 0 : i32
    %c0_i32_0 = arith.constant 0 : i32
    return %arg1, %c0_i32, %arg0 : i32, i32, i32
  }
  func.func @transform_1(%arg0: i32, %arg1: i32) -> (i32, i32) {
    %c0_i32 = arith.constant 0 : i32
    %c0_i32_0 = arith.constant 0 : i32
    %c0_i32_1 = arith.constant 0 : i32
    return %c0_i32, %c0_i32_0 : i32, i32
  }
  func.func @transform_2(%arg0: i32, %arg1: i32) -> (i32, i32) {
    %c0_i32 = arith.constant 0 : i32
    %c0_i32_0 = arith.constant 0 : i32
    %c0_i32_1 = arith.constant 0 : i32
    return %c0_i32, %c0_i32_0 : i32, i32
  }
  func.func @transform_3(%arg0: i32, %arg1: i32) -> (i32, i32) {
    %c0_i32 = arith.constant 0 : i32
    %c0_i32_0 = arith.constant 0 : i32
    %c0_i32_1 = arith.constant 0 : i32
    return %c0_i32, %c0_i32_0 : i32, i32
  }
  func.func @transform_4(%arg0: i32, %arg1: i32) -> (i32, i32) {
    %c0_i32 = arith.constant 0 : i32
    %c0_i32_0 = arith.constant 0 : i32
    %c0_i32_1 = arith.constant 0 : i32
    return %c0_i32, %c0_i32_0 : i32, i32
  }
  func.func @transform_5(%arg0: i32, %arg1: i32) -> (i32, i32) {
    %c0_i32 = arith.constant 0 : i32
    %c0_i32_0 = arith.constant 0 : i32
    %c0_i32_1 = arith.constant 0 : i32
    return %c0_i32, %c0_i32_0 : i32, i32
  }
  func.func @transform_6(%arg0: i32, %arg1: i32) -> (i32, i32) {
    %c0_i32 = arith.constant 0 : i32
    %c0_i32_0 = arith.constant 0 : i32
    %c0_i32_1 = arith.constant 0 : i32
    return %c0_i32, %c0_i32_0 : i32, i32
  }
  func.func @transform_7(%arg0: i32, %arg1: i32) -> (i32, i32) {
    %c0_i32 = arith.constant 0 : i32
    %c0_i32_0 = arith.constant 0 : i32
    %c0_i32_1 = arith.constant 0 : i32
    return %c0_i32, %c0_i32_0 : i32, i32
  }
  func.func @transform_8(%arg0: i32, %arg1: i32) -> (i32, i32) {
    %c0_i32 = arith.constant 0 : i32
    %c0_i32_0 = arith.constant 0 : i32
    return %c0_i32, %arg0 : i32, i32
  }
}

</mosaic_0001>

<llo_original>
// kernel: tpu_custom_call.1
$region0: #{tpu_custom_call.1}
  #allocation0 [shape = 'u32[]', space=smem, size = 0x4, offset = 0x4, fixed_abs, tag = 'smem constant byte address 0x4 - core index']
  #allocation1 [shape = 'u32[144,128]{1,0:T(1,128)}', space=vmem, size = 0x12000, scoped, tag = 'internal scratch']
  #allocation2 [shape = 'bf16[3,128,128]{2,1,0:T(16,128)(2,1)}', space=vmem, size = 0x18000, scoped, tag = 'scratch operand']
  #allocation3 [shape = 'f32[32,128]{1,0:T(8,128)}', space=vmem, size = 0x4000, scoped, tag = 'scratch operand']
  #allocation4 [shape = 'f32[32,128]{1,0:T(8,128)}', space=vmem, size = 0x4000, scoped, tag = 'scratch operand']
  %s0 = inlined_call_operand.vmem [shape: bf16[9,16,128], index: 0, kind: input, shape index: {}]
  %s1 = inlined_call_operand.vmem [shape: bf16[128,16], index: 1, kind: input, shape index: {}]
  %s2 = inlined_call_operand.vmem [shape: f32[128,1], index: 2, kind: input, shape index: {}]
  %s3 = inlined_call_operand.vmem [shape: bf16[128,32], index: 3, kind: input, shape index: {}]
  %s4 = inlined_call_operand.vmem [shape: f32[128,32], index: 4, kind: input, shape index: {}]
  %s5 = inlined_call_operand.vmem [shape: f32[128,1], index: 5, kind: input, shape index: {}]
  %s6 = inlined_call_operand.vmem [shape: f32[8,128], index: 6, kind: input, shape index: {}]
  %s7 = inlined_call_operand.vmem [shape: f32[8,1], index: 7, kind: input, shape index: {}]
  %s8 = inlined_call_operand.hbm [shape: f32[8,128], index: 8, kind: output, shape index: {}]
  %s9 = sld [smem:[#allocation0]]
  $region73: #{tpu_custom_call.1} parent=0
    _
  %s11 = ssub.s32 1, %s9
  %s12 = scalar_select 0, %s11, %s9
  $region1: #{tpu_custom_call.1} parent=0
    #allocation5 [shape = 'u8[4096]{0}', space=vmem, size = 0x1000, scoped, tag = 'output window, operand 0, single buffered']
    #allocation6 [shape = 's32[2]{0}', space=sflag, size = 0x8, scoped, tag = 'scoped memory for tpu_custom_call.1']
    %13 = vsyncpa [#allocation6], 0
    loop: start=0, step=1, limit=5
    $region2: #{tpu_custom_call.1} parent=1 // loop_pre_header
      _
    $region3: #{tpu_custom_call.1} parent=1 // loop_header
      %s15 = sphi 0, %s19
      %p16 = scmp.ge.s32.totalorder %s15, 5
      %s22 = sphi 0, %s34
      %s23 = sphi 0, %s30
      %s24 = sphi 0, %s22
      %s25 = sphi 0, %s23
      %s26 = sphi 0, %s24
      %s27 = sphi 0, %s25
      %s39 = sphi 0, %s41
      %s42 = sphi 0, %s39
      %s43 = sphi 0, %s42
      %s59 = sphi 0, %s43
      %s63 = sphi 0, %s63
      %s65 = sphi 0, %s63
      %s66 = sphi 0, %s65
      %s80 = sphi 0, %s66
      %s84 = sphi 0, %s84
      %s86 = sphi 0, %s84
      %s87 = sphi 0, %s86
      %s101 = sphi 0, %s87
      %s105 = sphi 0, %s105
      %s107 = sphi 0, %s105
      %s108 = sphi 0, %s107
      %s122 = sphi 0, %s108
      %s126 = sphi 0, %s126
      %s128 = sphi 0, %s126
      %s129 = sphi 0, %s128
      %s143 = sphi 0, %s129
      %s147 = sphi 0, %s147
      %s149 = sphi 0, %s147
      %s150 = sphi 0, %s149
      %s164 = sphi 0, %s150
      %s168 = sphi 0, %s168
      %s170 = sphi 0, %s168
      %s171 = sphi 0, %s170
      %s185 = sphi 0, %s171
      %s189 = sphi 0, %s189
      %s191 = sphi 0, %s189
      %s192 = sphi 0, %s191
      %s206 = sphi 0, %s192
      %s212 = sphi 0, %s214
      %s215 = sphi 0, %s212
      %s216 = sphi 0, %s215
      %s232 = sphi 0, %s216
    $region4: #{tpu_custom_call.1} parent=1 // loop_header_branch
      %18 = sbr.rel (%p16) target = $region8
    $region5: #{tpu_custom_call.1} parent=1 // loop_body
      %s20 = ssub.s32 %s15, 1
      %s21 = ssub.s32 %s15, 2
      %s28 = sadd.s32 1, %s23
      %p29 = scmp.ge.s32.totalorder %s28, 3
      %s30 = scalar_select %p29, 0, %s28
      %s31 = sadd.s32 1, %s22
      %s32 = scalar_select %p29, %s31, %s22
      %p33 = scmp.ge.s32.totalorder %s32, 1
      %s34 = scalar_select %p33, 0, %s32
      %s35 = ssub.s32 %s23, %s30
      %s36 = ssub.s32 %s22, %s34
      %s37 = sor.u32 %s35, %s36
      %p38 = scmp.eq.s32.totalorder %s37, 0
      %s40 = sadd.s32 %s39, 1
      %s41 = scalar_select %p38, %s39, %s40
      %p44 = pneg %p38
      %p45 = scmp.eq.s32.totalorder %s15, 2
      %p46 = por %p44, %p45
      %p47 = scmp.ne.s32.totalorder %s39, %s42
      %p48 = scmp.eq.s32.totalorder %s15, 0
      %p49 = por %p47, %p48
      %p50 = scmp.ne.s32.totalorder %s39, %s42
      %p51 = scmp.eq.s32.totalorder %s20, 2
      %p52 = por %p50, %p51
      %p53 = scmp.ne.s32.totalorder %s42, %s43
      %p54 = scmp.eq.s32.totalorder %s20, 0
      %p55 = por %p53, %p54
      %p56 = scmp.ne.s32.totalorder %s42, %s43
      %p57 = scmp.eq.s32.totalorder %s21, 2
      %p58 = por %p56, %p57
      %p60 = scmp.ne.s32.totalorder %s43, %s59
      %p61 = scmp.eq.s32.totalorder %s21, 0
      %p62 = por %p60, %p61
      %s64 = sadd.s32 %s63, 1
      %p67 = scmp.eq.s32.totalorder %s15, 2
      %p68 = scmp.ne.s32.totalorder %s63, %s65
      %p69 = scmp.eq.s32.totalorder %s15, 0
      %p70 = por %p68, %p69
      %p71 = scmp.ne.s32.totalorder %s63, %s65
      %p72 = scmp.eq.s32.totalorder %s20, 2
      %p73 = por %p71, %p72
      %p74 = scmp.ne.s32.totalorder %s65, %s66
      %p75 = scmp.eq.s32.totalorder %s20, 0
      %p76 = por %p74, %p75
      %p77 = scmp.ne.s32.totalorder %s65, %s66
      %p78 = scmp.eq.s32.totalorder %s21, 2
      %p79 = por %p77, %p78
      %p81 = scmp.ne.s32.totalorder %s66, %s80
      %p82 = scmp.eq.s32.totalorder %s21, 0
      %p83 = por %p81, %p82
      %s85 = sadd.s32 %s84, 1
      %p88 = scmp.eq.s32.totalorder %s15, 2
      %p89 = scmp.ne.s32.totalorder %s84, %s86
      %p90 = scmp.eq.s32.totalorder %s15, 0
      %p91 = por %p89, %p90
      %p92 = scmp.ne.s32.totalorder %s84, %s86
      %p93 = scmp.eq.s32.totalorder %s20, 2
      %p94 = por %p92, %p93
      %p95 = scmp.ne.s32.totalorder %s86, %s87
      %p96 = scmp.eq.s32.totalorder %s20, 0
      %p97 = por %p95, %p96
      %p98 = scmp.ne.s32.totalorder %s86, %s87
      %p99 = scmp.eq.s32.totalorder %s21, 2
      %p100 = por %p98, %p99
      %p102 = scmp.ne.s32.totalorder %s87, %s101
      %p103 = scmp.eq.s32.totalorder %s21, 0
      %p104 = por %p102, %p103
      %s106 = sadd.s32 %s105, 1
      %p109 = scmp.eq.s32.totalorder %s15, 2
      %p110 = scmp.ne.s32.totalorder %s105, %s107
      %p111 = scmp.eq.s32.totalorder %s15, 0
      %p112 = por %p110, %p111
      %p113 = scmp.ne.s32.totalorder %s105, %s107
      %p114 = scmp.eq.s32.totalorder %s20, 2
      %p115 = por %p113, %p114
      %p116 = scmp.ne.s32.totalorder %s107, %s108
      %p117 = scmp.eq.s32.totalorder %s20, 0
      %p118 = por %p116, %p117
      %p119 = scmp.ne.s32.totalorder %s107, %s108
      %p120 = scmp.eq.s32.totalorder %s21, 2
      %p121 = por %p119, %p120
      %p123 = scmp.ne.s32.totalorder %s108, %s122
      %p124 = scmp.eq.s32.totalorder %s21, 0
      %p125 = por %p123, %p124
      %s127 = sadd.s32 %s126, 1
      %p130 = scmp.eq.s32.totalorder %s15, 2
      %p131 = scmp.ne.s32.totalorder %s126, %s128
      %p132 = scmp.eq.s32.totalorder %s15, 0
      %p133 = por %p131, %p132
      %p134 = scmp.ne.s32.totalorder %s126, %s128
      %p135 = scmp.eq.s32.totalorder %s20, 2
      %p136 = por %p134, %p135
      %p137 = scmp.ne.s32.totalorder %s128, %s129
      %p138 = scmp.eq.s32.totalorder %s20, 0
      %p139 = por %p137, %p138
      %p140 = scmp.ne.s32.totalorder %s128, %s129
      %p141 = scmp.eq.s32.totalorder %s21, 2
      %p142 = por %p140, %p141
      %p144 = scmp.ne.s32.totalorder %s129, %s143
      %p145 = scmp.eq.s32.totalorder %s21, 0
      %p146 = por %p144, %p145
      %s148 = sadd.s32 %s147, 1
      %p151 = scmp.eq.s32.totalorder %s15, 2
      %p152 = scmp.ne.s32.totalorder %s147, %s149
      %p153 = scmp.eq.s32.totalorder %s15, 0
      %p154 = por %p152, %p153
      %p155 = scmp.ne.s32.totalorder %s147, %s149
      %p156 = scmp.eq.s32.totalorder %s20, 2
      %p157 = por %p155, %p156
      %p158 = scmp.ne.s32.totalorder %s149, %s150
      %p159 = scmp.eq.s32.totalorder %s20, 0
      %p160 = por %p158, %p159
      %p161 = scmp.ne.s32.totalorder %s149, %s150
      %p162 = scmp.eq.s32.totalorder %s21, 2
      %p163 = por %p161, %p162
      %p165 = scmp.ne.s32.totalorder %s150, %s164
      %p166 = scmp.eq.s32.totalorder %s21, 0
      %p167 = por %p165, %p166
      %s169 = sadd.s32 %s168, 1
      %p172 = scmp.eq.s32.totalorder %s15, 2
      %p173 = scmp.ne.s32.totalorder %s168, %s170
      %p174 = scmp.eq.s32.totalorder %s15, 0
      %p175 = por %p173, %p174
      %p176 = scmp.ne.s32.totalorder %s168, %s170
      %p177 = scmp.eq.s32.totalorder %s20, 2
      %p178 = por %p176, %p177
      %p179 = scmp.ne.s32.totalorder %s170, %s171
      %p180 = scmp.eq.s32.totalorder %s20, 0
      %p181 = por %p179, %p180
      %p182 = scmp.ne.s32.totalorder %s170, %s171
      %p183 = scmp.eq.s32.totalorder %s21, 2
      %p184 = por %p182, %p183
      %p186 = scmp.ne.s32.totalorder %s171, %s185
      %p187 = scmp.eq.s32.totalorder %s21, 0
      %p188 = por %p186, %p187
      %s190 = sadd.s32 %s189, 1
      %p193 = scmp.eq.s32.totalorder %s15, 2
      %p194 = scmp.ne.s32.totalorder %s189, %s191
      %p195 = scmp.eq.s32.totalorder %s15, 0
      %p196 = por %p194, %p195
      %p197 = scmp.ne.s32.totalorder %s189, %s191
      %p198 = scmp.eq.s32.totalorder %s20, 2
      %p199 = por %p197, %p198
      %p200 = scmp.ne.s32.totalorder %s191, %s192
      %p201 = scmp.eq.s32.totalorder %s20, 0
      %p202 = por %p200, %p201
      %p203 = scmp.ne.s32.totalorder %s191, %s192
      %p204 = scmp.eq.s32.totalorder %s21, 2
      %p205 = por %p203, %p204
      %p207 = scmp.ne.s32.totalorder %s192, %s206
      %p208 = scmp.eq.s32.totalorder %s21, 0
      %p209 = por %p207, %p208
      %s210 = ssub.s32 %s22, %s34
      %p211 = scmp.eq.s32.totalorder %s210, 0
      %s213 = sadd.s32 %s212, 1
      %s214 = scalar_select %p211, %s212, %s213
      %p217 = pneg %p211
      %p218 = scmp.eq.s32.totalorder %s15, 2
      %p219 = por %p217, %p218
      %p220 = scmp.ne.s32.totalorder %s212, %s215
      %p221 = scmp.eq.s32.totalorder %s15, 0
      %p222 = por %p220, %p221
      %p223 = scmp.ne.s32.totalorder %s212, %s215
      %p224 = scmp.eq.s32.totalorder %s20, 2
      %p225 = por %p223, %p224
      %p226 = scmp.ne.s32.totalorder %s215, %s216
      %p227 = scmp.eq.s32.totalorder %s20, 0
      %p228 = por %p226, %p227
      %p229 = scmp.ne.s32.totalorder %s215, %s216
      %p230 = scmp.eq.s32.totalorder %s21, 2
      %p231 = por %p229, %p230
      %p233 = scmp.ne.s32.totalorder %s216, %s232
      %p234 = scmp.eq.s32.totalorder %s21, 0
      %p235 = por %p233, %p234
      %p236 = scmp.le.s32.totalorder 1, %s15
      %p237 = scmp.lt.s32.totalorder %s15, 4
      %p238 = pnand %p236, %p237
      %p239 = pneg %p238
      // Predicated region
      $region9: #{tpu_custom_call.1} parent=5 // pred_check
        _
      $region10: #{tpu_custom_call.1} parent=5 // pred_check_branch
        %241 = sbr.rel (%p238) target = $region12
      $region11: #{tpu_custom_call.1} parent=5 // pred_region
        %s242 = ssub.s32 %s15, 1
        // Predicated region
        $region13: #{tpu_custom_call.1} parent=11 // pred_check
          %p243 = pneg %p76
        $region14: #{tpu_custom_call.1} parent=11 // pred_check_branch
          %245 = sbr.rel (%p243) target = $region16
        $region15: #{tpu_custom_call.1} parent=11 // pred_region
          _
        $region16: #{tpu_custom_call.1} parent=11 // pred_fallthru
          _
        // Predicated region
        $region17: #{tpu_custom_call.1} parent=11 // pred_check
          %p246 = pneg %p97
        $region18: #{tpu_custom_call.1} parent=11 // pred_check_branch
          %248 = sbr.rel (%p246) target = $region20
        $region19: #{tpu_custom_call.1} parent=11 // pred_region
          _
        $region20: #{tpu_custom_call.1} parent=11 // pred_fallthru
          _
        // Predicated region
        $region21: #{tpu_custom_call.1} parent=11 // pred_check
          %p249 = pneg %p118
        $region22: #{tpu_custom_call.1} parent=11 // pred_check_branch
          %251 = sbr.rel (%p249) target = $region24
        $region23: #{tpu_custom_call.1} parent=11 // pred_region
          _
        $region24: #{tpu_custom_call.1} parent=11 // pred_fallthru
          _
        // Predicated region
        $region25: #{tpu_custom_call.1} parent=11 // pred_check
          %p252 = pneg %p139
        $region26: #{tpu_custom_call.1} parent=11 // pred_check_branch
          %254 = sbr.rel (%p252) target = $region28
        $region27: #{tpu_custom_call.1} parent=11 // pred_region
          _
        $region28: #{tpu_custom_call.1} parent=11 // pred_fallthru
          _
        // Predicated region
        $region29: #{tpu_custom_call.1} parent=11 // pred_check
          %p255 = pneg %p160
        $region30: #{tpu_custom_call.1} parent=11 // pred_check_branch
          %257 = sbr.rel (%p255) target = $region32
        $region31: #{tpu_custom_call.1} parent=11 // pred_region
          _
        $region32: #{tpu_custom_call.1} parent=11 // pred_fallthru
          _
        // Predicated region
        $region33: #{tpu_custom_call.1} parent=11 // pred_check
          %p258 = pneg %p181
        $region34: #{tpu_custom_call.1} parent=11 // pred_check_branch
          %260 = sbr.rel (%p258) target = $region36
        $region35: #{tpu_custom_call.1} parent=11 // pred_region
          _
        $region36: #{tpu_custom_call.1} parent=11 // pred_fallthru
          _
        // Predicated region
        $region37: #{tpu_custom_call.1} parent=11 // pred_check
          %p261 = pneg %p202
        $region38: #{tpu_custom_call.1} parent=11 // pred_check_branch
          %263 = sbr.rel (%p261) target = $region40
        $region39: #{tpu_custom_call.1} parent=11 // pred_region
          _
        $region40: #{tpu_custom_call.1} parent=11 // pred_fallthru
          _
      $region12: #{tpu_custom_call.1} parent=5 // pred_fallthru
        _
      %p264 = scmp.lt.s32.totalorder %s15, 3
      // Predicated region
      $region41: #{tpu_custom_call.1} parent=5 // pred_check
        %p265 = pneg %p264
      $region42: #{tpu_custom_call.1} parent=5 // pred_check_branch
        %267 = sbr.rel (%p265) target = $region44
      $region43: #{tpu_custom_call.1} parent=5 // pred_region
        // Predicated region
        $region45: #{tpu_custom_call.1} parent=43 // pred_check
          %p268 = pneg %p49
        $region46: #{tpu_custom_call.1} parent=43 // pred_check_branch
          %270 = sbr.rel (%p268) target = $region48
        $region47: #{tpu_custom_call.1} parent=43 // pred_region
          %s271 = smul.u32 3, %s23
          %p272 = scmp.lt.s32.totalorder %s271, 8
          %s273 = scalar_select %p272, %s271, 8
          %p274 = scmp.lt.s32.totalorder %s22, 0
          %s275 = scalar_select %p274, %s22, 0
          %s276 = smul.addr %s273, 2
          %s277 = sadd.s32 %s275, %s276
          %s278 = smul.addr %s277, 4
          %s279 = scalar_lea.vmem %s0, %s278
          %s280 = smul.u32 3, %s23
        $region48: #{tpu_custom_call.1} parent=43 // pred_fallthru
          _
      $region44: #{tpu_custom_call.1} parent=5 // pred_fallthru
        _
      %p281 = scmp.le.s32.totalorder 1, %s15
      %p282 = scmp.lt.s32.totalorder %s15, 4
      %p283 = pnand %p281, %p282
      %p284 = pneg %p283
      // Predicated region
      $region49: #{tpu_custom_call.1} parent=5 // pred_check
        _
      $region50: #{tpu_custom_call.1} parent=5 // pred_check_branch
        %286 = sbr.rel (%p283) target = $region52
      $region51: #{tpu_custom_call.1} parent=5 // pred_region
        %s287 = ssub.s32 %s15, 1
        %s288 = smul.u32 3, %s25
        %p289 = scmp.lt.s32.totalorder %s288, 8
        %s290 = scalar_select %p289, %s288, 8
        %p291 = scmp.lt.s32.totalorder %s24, 0
        %s292 = scalar_select %p291, %s24, 0
        %s293 = smul.addr %s290, 2
        %s294 = sadd.s32 %s292, %s293
        %s295 = smul.addr %s294, 4
        %s296 = scalar_lea.vmem %s0, %s295
        %p297 = pneg %p55
        %p298 = pneg %p52
        %p299 = pneg %p76
        %p300 = pneg %p73
        %p301 = pneg %p97
        %p302 = pneg %p94
        %p303 = pneg %p118
        %p304 = pneg %p115
        %p305 = pneg %p139
        %p306 = pneg %p136
        %p307 = pneg %p160
        %p308 = pneg %p157
        %p309 = pneg %p181
        %p310 = pneg %p178
        %p311 = pneg %p202
        %p312 = pneg %p199
        %p313 = pneg %p228
        %p314 = pneg %p225
        %s315 = smul.u32 3, %s25
        %p316 = scmp.lt.s32.totalorder %s315, 8
        %s317 = scalar_select %p316, %s315, 8
        %p318 = scmp.lt.s32.totalorder %s24, 0
        %s319 = scalar_select %p318, %s24, 0
        %s320 = smul.addr %s317, 2
        %s321 = sadd.s32 %s319, %s320
        %s322 = smul.addr %s321, 4
        %s323 = scalar_lea.vmem %s0, %s322
        %s324 = smul.u32 3, %s25
        %p326 = scmp.eq.s32.totalorder %s25, 0
        // Predicated region
        $region53: #{tpu_custom_call.1} parent=51 // pred_check
          %p327 = pneg %p326
        $region54: #{tpu_custom_call.1} parent=51 // pred_check_branch
          %329 = sbr.rel (%p327) target = $region56
        $region55: #{tpu_custom_call.1} parent=51 // pred_region
          %330 = vst [vmem:[#allocation3] sm:$0xff] 0.0
          %331 = vst [vmem:[#allocation3 + $0x8] sm:$0xff] 0.0
          %332 = vst [vmem:[#allocation3 + $0x10] sm:$0xff] 0.0
          %333 = vst [vmem:[#allocation3 + $0x18] sm:$0xff] 0.0
          %334 = vst [vmem:[#allocation4] sm:$0xff] 0.0
          %335 = vst [vmem:[#allocation4 + $0x8] sm:$0xff] 0.0
          %336 = vst [vmem:[#allocation4 + $0x10] sm:$0xff] 0.0
          %337 = vst [vmem:[#allocation4 + $0x18] sm:$0xff] 0.0
        $region56: #{tpu_custom_call.1} parent=51 // pred_fallthru
          _
        %v338 = vld [vmem:[%s1] sm:$0xf]
        %v339 = vld [vmem:[%s1 + $0x4] sm:$0xf]
        %v340 = vld [vmem:[%s1 + $0x8] sm:$0xf]
        %v341 = vld [vmem:[%s1 + $0xc] sm:$0xf]
        %v342 = vld [vmem:[%s1 + $0x10] sm:$0xf]
        %v343 = vld [vmem:[%s1 + $0x14] sm:$0xf]
        %v344 = vld [vmem:[%s1 + $0x18] sm:$0xf]
        %v345 = vld [vmem:[%s1 + $0x1c] sm:$0xf]
        %v346 = vld [vmem:[%s1 + $0x20] sm:$0xf]
        %v347 = vld [vmem:[%s1 + $0x24] sm:$0xf]
        %v348 = vld [vmem:[%s1 + $0x28] sm:$0xf]
        %v349 = vld [vmem:[%s1 + $0x2c] sm:$0xf]
        %v350 = vld [vmem:[%s1 + $0x30] sm:$0xf]
        %v351 = vld [vmem:[%s1 + $0x34] sm:$0xf]
        %v352 = vld [vmem:[%s1 + $0x38] sm:$0xf]
        %v353 = vld [vmem:[%s1 + $0x3c] sm:$0xf]
        %v354 = vld [vmem:[%s2] sm:$0xff]
        %v355 = vld [vmem:[%s2 + $0x8] sm:$0xff]
        %v356 = vld [vmem:[%s2 + $0x10] sm:$0xff]
        %v357 = vld [vmem:[%s2 + $0x18] sm:$0xff]
        %v358 = vld [vmem:[%s2 + $0x20] sm:$0xff]
        %v359 = vld [vmem:[%s2 + $0x28] sm:$0xff]
        %v360 = vld [vmem:[%s2 + $0x30] sm:$0xff]
        %v361 = vld [vmem:[%s2 + $0x38] sm:$0xff]
        %v362 = vld [vmem:[%s2 + $0x40] sm:$0xff]
        %v363 = vld [vmem:[%s2 + $0x48] sm:$0xff]
        %v364 = vld [vmem:[%s2 + $0x50] sm:$0xff]
        %v365 = vld [vmem:[%s2 + $0x58] sm:$0xff]
        %v366 = vld [vmem:[%s2 + $0x60] sm:$0xff]
        %v367 = vld [vmem:[%s2 + $0x68] sm:$0xff]
        %v368 = vld [vmem:[%s2 + $0x70] sm:$0xff]
        %v369 = vld [vmem:[%s2 + $0x78] sm:$0xff]
        %v370 = vld [vmem:[%s323] sm:$0xf]
        %v371 = vld [vmem:[%s323 + $0x4] sm:$0xf]
        %373 = vset.pattern.permute.xlu0 0
        %374 = vperm.xlu0 %373, %v354
        %v375 = vpop.permute.xlu0 %374
        %378 = vset.pattern.permute.xlu0 0
        %379 = vperm.xlu0 %378, %v355
        %v380 = vpop.permute.xlu0 %379
        %383 = vset.pattern.permute.xlu0 0
        %384 = vperm.xlu0 %383, %v356
        %v385 = vpop.permute.xlu0 %384
        %388 = vset.pattern.permute.xlu0 0
        %389 = vperm.xlu0 %388, %v357
        %v390 = vpop.permute.xlu0 %389
        %393 = vset.pattern.permute.xlu0 0
        %394 = vperm.xlu0 %393, %v358
        %v395 = vpop.permute.xlu0 %394
        %398 = vset.pattern.permute.xlu0 0
        %399 = vperm.xlu0 %398, %v359
        %v400 = vpop.permute.xlu0 %399
        %403 = vset.pattern.permute.xlu0 0
        %404 = vperm.xlu0 %403, %v360
        %v405 = vpop.permute.xlu0 %404
        %408 = vset.pattern.permute.xlu0 0
        %409 = vperm.xlu0 %408, %v361
        %v410 = vpop.permute.xlu0 %409
        %413 = vset.pattern.permute.xlu0 0
        %414 = vperm.xlu0 %413, %v362
        %v415 = vpop.permute.xlu0 %414
        %418 = vset.pattern.permute.xlu0 0
        %419 = vperm.xlu0 %418, %v363
        %v420 = vpop.permute.xlu0 %419
        %423 = vset.pattern.permute.xlu0 0
        %424 = vperm.xlu0 %423, %v364
        %v425 = vpop.permute.xlu0 %424
        %428 = vset.pattern.permute.xlu0 0
        %429 = vperm.xlu0 %428, %v365
        %v430 = vpop.permute.xlu0 %429
        %433 = vset.pattern.permute.xlu0 0
        %434 = vperm.xlu0 %433, %v366
        %v435 = vpop.permute.xlu0 %434
        %438 = vset.pattern.permute.xlu0 0
        %439 = vperm.xlu0 %438, %v367
        %v440 = vpop.permute.xlu0 %439
        %443 = vset.pattern.permute.xlu0 0
        %444 = vperm.xlu0 %443, %v368
        %v445 = vpop.permute.xlu0 %444
        %448 = vset.pattern.permute.xlu0 0
        %449 = vperm.xlu0 %448, %v369
        %v450 = vpop.permute.xlu0 %449
        %v468 = vunpack.c.l.b16 %v338
        %v469 = vunpack.c.l.b16 %v339
        %v470 = vunpack.c.l.b16 %v340
        %v471 = vunpack.c.l.b16 %v341
        %v472 = vunpack.c.l.b16 %v342
        %v473 = vunpack.c.l.b16 %v343
        %v474 = vunpack.c.l.b16 %v344
        %v475 = vunpack.c.l.b16 %v345
        %v476 = vunpack.c.l.b16 %v346
        %v477 = vunpack.c.l.b16 %v347
        %v478 = vunpack.c.l.b16 %v348
        %v479 = vunpack.c.l.b16 %v349
        %v480 = vunpack.c.l.b16 %v350
        %v481 = vunpack.c.l.b16 %v351
        %v482 = vunpack.c.l.b16 %v352
        %v483 = vunpack.c.l.b16 %v353
        %v484 = vpack.c.b16 %v469, %v468
        %v485 = vpack.c.b16 %v471, %v470
        %v486 = vpack.c.b16 %v473, %v472
        %v487 = vpack.c.b16 %v475, %v474
        %v488 = vpack.c.b16 %v477, %v476
        %v489 = vpack.c.b16 %v479, %v478
        %v490 = vpack.c.b16 %v481, %v480
        %v491 = vpack.c.b16 %v483, %v482
        %v494 = vunpack.c.l.b16 %v370
        %v495 = vunpack.c.l.b16 %v371
        %v496 = vpack.c.b16 %v495, %v494
        %vm498 = vcmask 130048
        %v500 = vsel %vm498, %v484, 0
        %v503 = vsel %vm498, %v485, 0
        %v506 = vsel %vm498, %v486, 0
        %v509 = vsel %vm498, %v487, 0
        %v512 = vsel %vm498, %v488, 0
        %v515 = vsel %vm498, %v489, 0
        %v518 = vsel %vm498, %v490, 0
        %v521 = vsel %vm498, %v491, 0
        %523 = vmatprep.subr.bf16.mxu0 0
        %524 = vmatpush1.bf16.msra.mxu0 %v496
        %525 = vmatprep.subr.bf16.mxu0 0
        %526 = vmatpush1.bf16.msra.mxu0 0
        %527 = vmatprep.subr.bf16.mxu0 0
        %528 = vmatpush1.bf16.msra.mxu0 0
        %529 = vmatprep.subr.bf16.mxu0 0
        %530 = vmatpush1.bf16.msra.mxu0 0
        %531 = vmatprep.subr.bf16.mxu0 0
        %532 = vmatpush1.bf16.msra.mxu0 0
        %533 = vmatprep.subr.bf16.mxu0 0
        %534 = vmatpush1.bf16.msra.mxu0 0
        %535 = vmatprep.subr.bf16.mxu0 0
        %536 = vmatpush1.bf16.msra.mxu0 0
        %537 = vmatprep.subr.bf16.mxu0 0
        %538 = vmatpush1.bf16.msra.mxu0 0
        %539 = vmatprep.subr.bf16.mxu0 0
        %540 = vmatpush1.bf16.msra.mxu0 0
        %541 = vmatprep.subr.bf16.mxu0 0
        %542 = vmatpush1.bf16.msra.mxu0 0
        %543 = vmatprep.subr.bf16.mxu0 0
        %544 = vmatpush1.bf16.msra.mxu0 0
        %545 = vmatprep.subr.bf16.mxu0 0
        %546 = vmatpush1.bf16.msra.mxu0 0
        %547 = vmatprep.subr.bf16.mxu0 0
        %548 = vmatpush1.bf16.msra.mxu0 0
        %549 = vmatprep.subr.bf16.mxu0 0
        %550 = vmatpush1.bf16.msra.mxu0 0
        %551 = vmatprep.subr.bf16.mxu0 0
        %552 = vmatpush1.bf16.msra.mxu0 0
        %553 = vmatprep.subr.bf16.mxu0 0
        %554 = vmatpush1.bf16.msra.mxu0 0
        %555 = vmatprep.mubr.bf16.mxu0 0
        %556 = vmatmul.mubr.bf16.gmra.mrb[0].mxu0 %v500
        %v557 = vpop.f32.mrb[0].mxu0
        %v558 = vadd.f32 %v375, %v557
        %v559 = vpop.f32.mrb[0].mxu0
        %v560 = vpop.f32.mrb[0].mxu0
        %v561 = vadd.f32 %v380, %v560
        %v562 = vpop.f32.mrb[0].mxu0
        %563 = vmatprep.mubr.bf16.mxu0 0
        %564 = vmatmul.mubr.bf16.gmra.mrb[0].mxu0 %v503
        %v565 = vpop.f32.mrb[0].mxu0
        %v566 = vadd.f32 %v385, %v565
        %v567 = vpop.f32.mrb[0].mxu0
        %v568 = vpop.f32.mrb[0].mxu0
        %v569 = vadd.f32 %v390, %v568
        %v570 = vpop.f32.mrb[0].mxu0
        %571 = vmatprep.mubr.bf16.mxu0 0
        %572 = vmatmul.mubr.bf16.gmra.mrb[0].mxu0 %v506
        %v573 = vpop.f32.mrb[0].mxu0
        %v574 = vadd.f32 %v395, %v573
        %v575 = vpop.f32.mrb[0].mxu0
        %v576 = vpop.f32.mrb[0].mxu0
        %v577 = vadd.f32 %v400, %v576
        %v578 = vpop.f32.mrb[0].mxu0
        %579 = vmatprep.mubr.bf16.mxu0 0
        %580 = vmatmul.mubr.bf16.gmra.mrb[0].mxu0 %v509
        %v581 = vpop.f32.mrb[0].mxu0
        %v582 = vadd.f32 %v405, %v581
        %v583 = vpop.f32.mrb[0].mxu0
        %v584 = vpop.f32.mrb[0].mxu0
        %v585 = vadd.f32 %v410, %v584
        %v586 = vpop.f32.mrb[0].mxu0
        %587 = vmatprep.mubr.bf16.mxu0 0
        %588 = vmatmul.mubr.bf16.gmra.mrb[0].mxu0 %v512
        %v589 = vpop.f32.mrb[0].mxu0
        %v590 = vadd.f32 %v415, %v589
        %v591 = vpop.f32.mrb[0].mxu0
        %v592 = vpop.f32.mrb[0].mxu0
        %v593 = vadd.f32 %v420, %v592
        %v594 = vpop.f32.mrb[0].mxu0
        %595 = vmatprep.mubr.bf16.mxu0 0
        %596 = vmatmul.mubr.bf16.gmra.mrb[0].mxu0 %v515
        %v597 = vpop.f32.mrb[0].mxu0
        %v598 = vadd.f32 %v425, %v597
        %v599 = vpop.f32.mrb[0].mxu0
        %v600 = vpop.f32.mrb[0].mxu0
        %v601 = vadd.f32 %v430, %v600
        %v602 = vpop.f32.mrb[0].mxu0
        %603 = vmatprep.mubr.bf16.mxu0 0
        %604 = vmatmul.mubr.bf16.gmra.mrb[0].mxu0 %v518
        %v605 = vpop.f32.mrb[0].mxu0
        %v606 = vadd.f32 %v435, %v605
        %v607 = vpop.f32.mrb[0].mxu0
        %v608 = vpop.f32.mrb[0].mxu0
        %v609 = vadd.f32 %v440, %v608
        %v610 = vpop.f32.mrb[0].mxu0
        %611 = vmatprep.mubr.bf16.mxu0 0
        %612 = vmatmul.mubr.bf16.gmra.mrb[0].mxu0 %v521
        %v613 = vpop.f32.mrb[0].mxu0
        %v614 = vadd.f32 %v445, %v613
        %v615 = vpop.f32.mrb[0].mxu0
        %v616 = vpop.f32.mrb[0].mxu0
        %v617 = vadd.f32 %v450, %v616
        %v618 = vpop.f32.mrb[0].mxu0
        %619 = vdwg.mxu0
        %v620 = vpack.c.bf16 %v561, %v558
        %v621 = vpack.c.bf16 %v569, %v566
        %v622 = vpack.c.bf16 %v577, %v574
        %v623 = vpack.c.bf16 %v585, %v582
        %v624 = vpack.c.bf16 %v593, %v590
        %v625 = vpack.c.bf16 %v601, %v598
        %v626 = vpack.c.bf16 %v609, %v606
        %v627 = vpack.c.bf16 %v617, %v614
        %628 = vst [vmem:[#allocation2] sm:$0xff] %v620
        %629 = vst [vmem:[#allocation2 + $0x8] sm:$0xff] %v621
        %630 = vst [vmem:[#allocation2 + $0x10] sm:$0xff] %v622
        %631 = vst [vmem:[#allocation2 + $0x18] sm:$0xff] %v623
        %632 = vst [vmem:[#allocation2 + $0x20] sm:$0xff] %v624
        %633 = vst [vmem:[#allocation2 + $0x28] sm:$0xff] %v625
        %634 = vst [vmem:[#allocation2 + $0x30] sm:$0xff] %v626
        %635 = vst [vmem:[#allocation2 + $0x38] sm:$0xff] %v627
        %s636 = scalar_lea.vmem %s323, 8
        %v637 = vld [vmem:[%s636] sm:$0xf]
        %v638 = vld [vmem:[%s636 + $0x4] sm:$0xf]
        %v641 = vunpack.c.l.b16 %v637
        %v642 = vunpack.c.l.b16 %v638
        %v643 = vpack.c.b16 %v642, %v641
        %645 = vmatprep.subr.bf16.mxu0 0
        %646 = vmatpush1.bf16.msra.mxu0 %v643
        %647 = vmatprep.subr.bf16.mxu0 0
        %648 = vmatpush1.bf16.msra.mxu0 0
        %649 = vmatprep.subr.bf16.mxu0 0
        %650 = vmatpush1.bf16.msra.mxu0 0
        %651 = vmatprep.subr.bf16.mxu0 0
        %652 = vmatpush1.bf16.msra.mxu0 0
        %653 = vmatprep.subr.bf16.mxu0 0
        %654 = vmatpush1.bf16.msra.mxu0 0
        %655 = vmatprep.subr.bf16.mxu0 0
        %656 = vmatpush1.bf16.msra.mxu0 0
        %657 = vmatprep.subr.bf16.mxu0 0
        %658 = vmatpush1.bf16.msra.mxu0 0
        %659 = vmatprep.subr.bf16.mxu0 0
        %660 = vmatpush1.bf16.msra.mxu0 0
        %661 = vmatprep.subr.bf16.mxu0 0
        %662 = vmatpush1.bf16.msra.mxu0 0
        %663 = vmatprep.subr.bf16.mxu0 0
        %664 = vmatpush1.bf16.msra.mxu0 0
        %665 = vmatprep.subr.bf16.mxu0 0
        %666 = vmatpush1.bf16.msra.mxu0 0
        %667 = vmatprep.subr.bf16.mxu0 0
        %668 = vmatpush1.bf16.msra.mxu0 0
        %669 = vmatprep.subr.bf16.mxu0 0
        %670 = vmatpush1.bf16.msra.mxu0 0
        %671 = vmatprep.subr.bf16.mxu0 0
        %672 = vmatpush1.bf16.msra.mxu0 0
        %673 = vmatprep.subr.bf16.mxu0 0
        %674 = vmatpush1.bf16.msra.mxu0 0
        %675 = vmatprep.subr.bf16.mxu0 0
        %676 = vmatpush1.bf16.msra.mxu0 0
        %677 = vmatprep.mubr.bf16.mxu0 0
        %678 = vmatmul.mubr.bf16.gmra.mrb[0].mxu0 %v500
        %v679 = vpop.f32.mrb[0].mxu0
        %v680 = vadd.f32 %v375, %v679
        %v681 = vpop.f32.mrb[0].mxu0
        %v682 = vpop.f32.mrb[0].mxu0
        %v683 = vadd.f32 %v380, %v682
        %v684 = vpop.f32.mrb[0].mxu0
        %685 = vmatprep.mubr.bf16.mxu0 0
        %686 = vmatmul.mubr.bf16.gmra.mrb[0].mxu0 %v503
        %v687 = vpop.f32.mrb[0].mxu0
        %v688 = vadd.f32 %v385, %v687
        %v689 = vpop.f32.mrb[0].mxu0
        %v690 = vpop.f32.mrb[0].mxu0
        %v691 = vadd.f32 %v390, %v690
        %v692 = vpop.f32.mrb[0].mxu0
        %693 = vmatprep.mubr.bf16.mxu0 0
        %694 = vmatmul.mubr.bf16.gmra.mrb[0].mxu0 %v506
        %v695 = vpop.f32.mrb[0].mxu0
        %v696 = vadd.f32 %v395, %v695
        %v697 = vpop.f32.mrb[0].mxu0
        %v698 = vpop.f32.mrb[0].mxu0
        %v699 = vadd.f32 %v400, %v698
        %v700 = vpop.f32.mrb[0].mxu0
        %701 = vmatprep.mubr.bf16.mxu0 0
        %702 = vmatmul.mubr.bf16.gmra.mrb[0].mxu0 %v509
        %v703 = vpop.f32.mrb[0].mxu0
        %v704 = vadd.f32 %v405, %v703
        %v705 = vpop.f32.mrb[0].mxu0
        %v706 = vpop.f32.mrb[0].mxu0
        %v707 = vadd.f32 %v410, %v706
        %v708 = vpop.f32.mrb[0].mxu0
        %709 = vmatprep.mubr.bf16.mxu0 0
        %710 = vmatmul.mubr.bf16.gmra.mrb[0].mxu0 %v512
        %v711 = vpop.f32.mrb[0].mxu0
        %v712 = vadd.f32 %v415, %v711
        %v713 = vpop.f32.mrb[0].mxu0
        %v714 = vpop.f32.mrb[0].mxu0
        %v715 = vadd.f32 %v420, %v714
        %v716 = vpop.f32.mrb[0].mxu0
        %717 = vmatprep.mubr.bf16.mxu0 0
        %718 = vmatmul.mubr.bf16.gmra.mrb[0].mxu0 %v515
        %v719 = vpop.f32.mrb[0].mxu0
        %v720 = vadd.f32 %v425, %v719
        %v721 = vpop.f32.mrb[0].mxu0
        %v722 = vpop.f32.mrb[0].mxu0
        %v723 = vadd.f32 %v430, %v722
        %v724 = vpop.f32.mrb[0].mxu0
        %725 = vmatprep.mubr.bf16.mxu0 0
        %726 = vmatmul.mubr.bf16.gmra.mrb[0].mxu0 %v518
        %v727 = vpop.f32.mrb[0].mxu0
        %v728 = vadd.f32 %v435, %v727
        %v729 = vpop.f32.mrb[0].mxu0
        %v730 = vpop.f32.mrb[0].mxu0
        %v731 = vadd.f32 %v440, %v730
        %v732 = vpop.f32.mrb[0].mxu0
        %733 = vmatprep.mubr.bf16.mxu0 0
        %734 = vmatmul.mubr.bf16.gmra.mrb[0].mxu0 %v521
        %v735 = vpop.f32.mrb[0].mxu0
        %v736 = vadd.f32 %v445, %v735
        %v737 = vpop.f32.mrb[0].mxu0
        %v738 = vpop.f32.mrb[0].mxu0
        %v739 = vadd.f32 %v450, %v738
        %v740 = vpop.f32.mrb[0].mxu0
        %741 = vdwg.mxu0
        %v742 = vpack.c.bf16 %v683, %v680
        %v743 = vpack.c.bf16 %v691, %v688
        %v744 = vpack.c.bf16 %v699, %v696
        %v745 = vpack.c.bf16 %v707, %v704
        %v746 = vpack.c.bf16 %v715, %v712
        %v747 = vpack.c.bf16 %v723, %v720
        %v748 = vpack.c.bf16 %v731, %v728
        %v749 = vpack.c.bf16 %v739, %v736
        %s750 = scalar_lea.vmem [#allocation2], 64
        %751 = vst [vmem:[%s750] sm:$0xff] %v742
        %752 = vst [vmem:[%s750 + $0x8] sm:$0xff] %v743
        %753 = vst [vmem:[%s750 + $0x10] sm:$0xff] %v744
        %754 = vst [vmem:[%s750 + $0x18] sm:$0xff] %v745
        %755 = vst [vmem:[%s750 + $0x20] sm:$0xff] %v746
        %756 = vst [vmem:[%s750 + $0x28] sm:$0xff] %v747
        %757 = vst [vmem:[%s750 + $0x30] sm:$0xff] %v748
        %758 = vst [vmem:[%s750 + $0x38] sm:$0xff] %v749
        %s759 = scalar_lea.vmem %s323, 16
        %v760 = vld [vmem:[%s759] sm:$0xf]
        %v761 = vld [vmem:[%s759 + $0x4] sm:$0xf]
        %v764 = vunpack.c.l.b16 %v760
        %v765 = vunpack.c.l.b16 %v761
        %v766 = vpack.c.b16 %v765, %v764
        %768 = vmatprep.subr.bf16.mxu0 0
        %769 = vmatpush1.bf16.msra.mxu0 %v766
        %770 = vmatprep.subr.bf16.mxu0 0
        %771 = vmatpush1.bf16.msra.mxu0 0
        %772 = vmatprep.subr.bf16.mxu0 0
        %773 = vmatpush1.bf16.msra.mxu0 0
        %774 = vmatprep.subr.bf16.mxu0 0
        %775 = vmatpush1.bf16.msra.mxu0 0
        %776 = vmatprep.subr.bf16.mxu0 0
        %777 = vmatpush1.bf16.msra.mxu0 0
        %778 = vmatprep.subr.bf16.mxu0 0
        %779 = vmatpush1.bf16.msra.mxu0 0
        %780 = vmatprep.subr.bf16.mxu0 0
        %781 = vmatpush1.bf16.msra.mxu0 0
        %782 = vmatprep.subr.bf16.mxu0 0
        %783 = vmatpush1.bf16.msra.mxu0 0
        %784 = vmatprep.subr.bf16.mxu0 0
        %785 = vmatpush1.bf16.msra.mxu0 0
        %786 = vmatprep.subr.bf16.mxu0 0
        %787 = vmatpush1.bf16.msra.mxu0 0
        %788 = vmatprep.subr.bf16.mxu0 0
        %789 = vmatpush1.bf16.msra.mxu0 0
        %790 = vmatprep.subr.bf16.mxu0 0
        %791 = vmatpush1.bf16.msra.mxu0 0
        %792 = vmatprep.subr.bf16.mxu0 0
        %793 = vmatpush1.bf16.msra.mxu0 0
        %794 = vmatprep.subr.bf16.mxu0 0
        %795 = vmatpush1.bf16.msra.mxu0 0
        %796 = vmatprep.subr.bf16.mxu0 0
        %797 = vmatpush1.bf16.msra.mxu0 0
        %798 = vmatprep.subr.bf16.mxu0 0
        %799 = vmatpush1.bf16.msra.mxu0 0
        %800 = vmatprep.mubr.bf16.mxu0 0
        %801 = vmatmul.mubr.bf16.gmra.mrb[0].mxu0 %v500
        %v802 = vpop.f32.mrb[0].mxu0
        %v803 = vadd.f32 %v375, %v802
        %v804 = vpop.f32.mrb[0].mxu0
        %v805 = vpop.f32.mrb[0].mxu0
        %v806 = vadd.f32 %v380, %v805
        %v807 = vpop.f32.mrb[0].mxu0
        %808 = vmatprep.mubr.bf16.mxu0 0
        %809 = vmatmul.mubr.bf16.gmra.mrb[0].mxu0 %v503
        %v810 = vpop.f32.mrb[0].mxu0
        %v811 = vadd.f32 %v385, %v810
        %v812 = vpop.f32.mrb[0].mxu0
        %v813 = vpop.f32.mrb[0].mxu0
        %v814 = vadd.f32 %v390, %v813
        %v815 = vpop.f32.mrb[0].mxu0
        %816 = vmatprep.mubr.bf16.mxu0 0
        %817 = vmatmul.mubr.bf16.gmra.mrb[0].mxu0 %v506
        %v818 = vpop.f32.mrb[0].mxu0
        %v819 = vadd.f32 %v395, %v818
        %v820 = vpop.f32.mrb[0].mxu0
        %v821 = vpop.f32.mrb[0].mxu0
        %v822 = vadd.f32 %v400, %v821
        %v823 = vpop.f32.mrb[0].mxu0
        %824 = vmatprep.mubr.bf16.mxu0 0
        %825 = vmatmul.mubr.bf16.gmra.mrb[0].mxu0 %v509
        %v826 = vpop.f32.mrb[0].mxu0
        %v827 = vadd.f32 %v405, %v826
        %v828 = vpop.f32.mrb[0].mxu0
        %v829 = vpop.f32.mrb[0].mxu0
        %v830 = vadd.f32 %v410, %v829
        %v831 = vpop.f32.mrb[0].mxu0
        %832 = vmatprep.mubr.bf16.mxu0 0
        %833 = vmatmul.mubr.bf16.gmra.mrb[0].mxu0 %v512
        %v834 = vpop.f32.mrb[0].mxu0
        %v835 = vadd.f32 %v415, %v834
        %v836 = vpop.f32.mrb[0].mxu0
        %v837 = vpop.f32.mrb[0].mxu0
        %v838 = vadd.f32 %v420, %v837
        %v839 = vpop.f32.mrb[0].mxu0
        %840 = vmatprep.mubr.bf16.mxu0 0
        %841 = vmatmul.mubr.bf16.gmra.mrb[0].mxu0 %v515
        %v842 = vpop.f32.mrb[0].mxu0
        %v843 = vadd.f32 %v425, %v842
        %v844 = vpop.f32.mrb[0].mxu0
        %v845 = vpop.f32.mrb[0].mxu0
        %v846 = vadd.f32 %v430, %v845
        %v847 = vpop.f32.mrb[0].mxu0
        %848 = vmatprep.mubr.bf16.mxu0 0
        %849 = vmatmul.mubr.bf16.gmra.mrb[0].mxu0 %v518
        %v850 = vpop.f32.mrb[0].mxu0
        %v851 = vadd.f32 %v435, %v850
        %v852 = vpop.f32.mrb[0].mxu0
        %v853 = vpop.f32.mrb[0].mxu0
        %v854 = vadd.f32 %v440, %v853
        %v855 = vpop.f32.mrb[0].mxu0
        %856 = vmatprep.mubr.bf16.mxu0 0
        %857 = vmatmul.mubr.bf16.gmra.mrb[0].mxu0 %v521
        %v858 = vpop.f32.mrb[0].mxu0
        %v859 = vadd.f32 %v445, %v858
        %v860 = vpop.f32.mrb[0].mxu0
        %v861 = vpop.f32.mrb[0].mxu0
        %v862 = vadd.f32 %v450, %v861
        %v863 = vpop.f32.mrb[0].mxu0
        %864 = vdwg.mxu0
        %v865 = vpack.c.bf16 %v806, %v803
        %v866 = vpack.c.bf16 %v814, %v811
        %v867 = vpack.c.bf16 %v822, %v819
        %v868 = vpack.c.bf16 %v830, %v827
        %v869 = vpack.c.bf16 %v838, %v835
        %v870 = vpack.c.bf16 %v846, %v843
        %v871 = vpack.c.bf16 %v854, %v851
        %v872 = vpack.c.bf16 %v862, %v859
        %s873 = scalar_lea.vmem [#allocation2], 128
        %874 = vst [vmem:[%s873] sm:$0xff] %v865
        %875 = vst [vmem:[%s873 + $0x8] sm:$0xff] %v866
        %876 = vst [vmem:[%s873 + $0x10] sm:$0xff] %v867
        %877 = vst [vmem:[%s873 + $0x18] sm:$0xff] %v868
        %878 = vst [vmem:[%s873 + $0x20] sm:$0xff] %v869
        %879 = vst [vmem:[%s873 + $0x28] sm:$0xff] %v870
        %880 = vst [vmem:[%s873 + $0x30] sm:$0xff] %v871
        %881 = vst [vmem:[%s873 + $0x38] sm:$0xff] %v872
        %v882 = vld [vmem:[%s3] sm:$0xf]
        %v883 = vld [vmem:[%s3 + $0x4] sm:$0xf]
        %v884 = vld [vmem:[%s3 + $0x8] sm:$0xf]
        %v885 = vld [vmem:[%s3 + $0xc] sm:$0xf]
        %v886 = vld [vmem:[%s3 + $0x10] sm:$0xf]
        %v887 = vld [vmem:[%s3 + $0x14] sm:$0xf]
        %v888 = vld [vmem:[%s3 + $0x18] sm:$0xf]
        %v889 = vld [vmem:[%s3 + $0x1c] sm:$0xf]
        %v890 = vld [vmem:[%s3 + $0x20] sm:$0xf]
        %v891 = vld [vmem:[%s3 + $0x24] sm:$0xf]
        %v892 = vld [vmem:[%s3 + $0x28] sm:$0xf]
        %v893 = vld [vmem:[%s3 + $0x2c] sm:$0xf]
        %v894 = vld [vmem:[%s3 + $0x30] sm:$0xf]
        %v895 = vld [vmem:[%s3 + $0x34] sm:$0xf]
        %v896 = vld [vmem:[%s3 + $0x38] sm:$0xf]
        %v897 = vld [vmem:[%s3 + $0x3c] sm:$0xf]
        %v898 = vld [vmem:[#allocation3] sm:$0xff]
        %v899 = vld [vmem:[#allocation3 + $0x8] sm:$0xff]
        %v900 = vld [vmem:[#allocation3 + $0x10] sm:$0xff]
        %v901 = vld [vmem:[#allocation3 + $0x18] sm:$0xff]
        %v902 = vld [vmem:[#allocation4] sm:$0xff]
        %v903 = vld [vmem:[#allocation4 + $0x8] sm:$0xff]
        %v904 = vld [vmem:[#allocation4 + $0x10] sm:$0xff]
        %v905 = vld [vmem:[#allocation4 + $0x18] sm:$0xff]
        %v906 = vpack.c.bf16 %v899, %v898
        %v907 = vpack.c.bf16 %v901, %v900
        %v908 = vld [vmem:[#allocation2] sm:$0xff]
        %v909 = vld [vmem:[#allocation2 + $0x8] sm:$0xff]
        %v910 = vld [vmem:[#allocation2 + $0x10] sm:$0xff]
        %v911 = vld [vmem:[#allocation2 + $0x18] sm:$0xff]
        %v912 = vld [vmem:[#allocation2 + $0x20] sm:$0xff]
        %v913 = vld [vmem:[#allocation2 + $0x28] sm:$0xff]
        %v914 = vld [vmem:[#allocation2 + $0x30] sm:$0xff]
        %v915 = vld [vmem:[#allocation2 + $0x38] sm:$0xff]
        %v916 = vunpack.c.l.bf16 %v908
        %v917 = vunpack.c.h.bf16 %v908
        %v918 = vunpack.c.l.bf16 %v909
        %v919 = vunpack.c.h.bf16 %v909
        %v920 = vunpack.c.l.bf16 %v910
        %v921 = vunpack.c.h.bf16 %v910
        %v922 = vunpack.c.l.bf16 %v911
        %v923 = vunpack.c.h.bf16 %v911
        %v924 = vunpack.c.l.bf16 %v912
        %v925 = vunpack.c.h.bf16 %v912
        %v926 = vunpack.c.l.bf16 %v913
        %v927 = vunpack.c.h.bf16 %v913
        %v928 = vunpack.c.l.bf16 %v914
        %v929 = vunpack.c.h.bf16 %v914
        %v930 = vunpack.c.l.bf16 %v915
        %v931 = vunpack.c.h.bf16 %v915
        %v948 = vunpack.c.l.b16 %v882
        %v949 = vunpack.c.l.b16 %v883
        %v950 = vunpack.c.l.b16 %v884
        %v951 = vunpack.c.l.b16 %v885
        %v952 = vunpack.c.l.b16 %v886
        %v953 = vunpack.c.l.b16 %v887
        %v954 = vunpack.c.l.b16 %v888
        %v955 = vunpack.c.l.b16 %v889
        %v956 = vunpack.c.l.b16 %v890
        %v957 = vunpack.c.l.b16 %v891
        %v958 = vunpack.c.l.b16 %v892
        %v959 = vunpack.c.l.b16 %v893
        %v960 = vunpack.c.l.b16 %v894
        %v961 = vunpack.c.l.b16 %v895
        %v962 = vunpack.c.l.b16 %v896
        %v963 = vunpack.c.l.b16 %v897
        %v964 = vpack.c.b16 %v949, %v948
        %v965 = vpack.c.b16 %v951, %v950
        %v966 = vpack.c.b16 %v953, %v952
        %v967 = vpack.c.b16 %v955, %v954
        %v968 = vpack.c.b16 %v957, %v956
        %v969 = vpack.c.b16 %v959, %v958
        %v970 = vpack.c.b16 %v961, %v960
        %v971 = vpack.c.b16 %v963, %v962
        %vm972 = vcmask 261120
        %v974 = vsel %vm972, %v964, 0
        %v977 = vsel %vm972, %v965, 0
        %v980 = vsel %vm972, %v966, 0
        %v983 = vsel %vm972, %v967, 0
        %v986 = vsel %vm972, %v968, 0
        %v989 = vsel %vm972, %v969, 0
        %v992 = vsel %vm972, %v970, 0
        %v995 = vsel %vm972, %v971, 0
        %997 = vmatprep.subr.bf16.mxu0 0
        %998 = vmatpush1.bf16.msra.mxu0 %v906
        %999 = vmatprep.subr.bf16.mxu0 0
        %1000 = vmatpush1.bf16.msra.mxu0 %v907
        %1001 = vmatprep.subr.bf16.mxu0 0
        %1002 = vmatpush1.bf16.msra.mxu0 0
        %1003 = vmatprep.subr.bf16.mxu0 0
        %1004 = vmatpush1.bf16.msra.mxu0 0
        %1005 = vmatprep.subr.bf16.mxu0 0
        %1006 = vmatpush1.bf16.msra.mxu0 0
        %1007 = vmatprep.subr.bf16.mxu0 0
        %1008 = vmatpush1.bf16.msra.mxu0 0
        %1009 = vmatprep.subr.bf16.mxu0 0
        %1010 = vmatpush1.bf16.msra.mxu0 0
        %1011 = vmatprep.subr.bf16.mxu0 0
        %1012 = vmatpush1.bf16.msra.mxu0 0
        %1013 = vmatprep.subr.bf16.mxu0 0
        %1014 = vmatpush1.bf16.msra.mxu0 0
        %1015 = vmatprep.subr.bf16.mxu0 0
        %1016 = vmatpush1.bf16.msra.mxu0 0
        %1017 = vmatprep.subr.bf16.mxu0 0
        %1018 = vmatpush1.bf16.msra.mxu0 0
        %1019 = vmatprep.subr.bf16.mxu0 0
        %1020 = vmatpush1.bf16.msra.mxu0 0
        %1021 = vmatprep.subr.bf16.mxu0 0
        %1022 = vmatpush1.bf16.msra.mxu0 0
        %1023 = vmatprep.subr.bf16.mxu0 0
        %1024 = vmatpush1.bf16.msra.mxu0 0
        %1025 = vmatprep.subr.bf16.mxu0 0
        %1026 = vmatpush1.bf16.msra.mxu0 0
        %1027 = vmatprep.subr.bf16.mxu0 0
        %1028 = vmatpush1.bf16.msra.mxu0 0
        %1029 = vmatprep.mubr.bf16.mxu0 0
        %1030 = vmatmul.mubr.bf16.gmra.mrb[0].mxu0 %v974
        %v1031 = vpop.f32.mrb[0].mxu0
        %v1032 = vadd.f32 %v916, %v1031
        %v1033 = vpop.f32.mrb[0].mxu0
        %v1034 = vpop.f32.mrb[0].mxu0
        %v1035 = vadd.f32 %v917, %v1034
        %v1036 = vpop.f32.mrb[0].mxu0
        %1037 = vmatprep.mubr.bf16.mxu0 0
        %1038 = vmatmul.mubr.bf16.gmra.mrb[0].mxu0 %v977
        %v1039 = vpop.f32.mrb[0].mxu0
        %v1040 = vadd.f32 %v918, %v1039
        %v1041 = vpop.f32.mrb[0].mxu0
        %v1042 = vpop.f32.mrb[0].mxu0
        %v1043 = vadd.f32 %v919, %v1042
        %v1044 = vpop.f32.mrb[0].mxu0
        %1045 = vmatprep.mubr.bf16.mxu0 0
        %1046 = vmatmul.mubr.bf16.gmra.mrb[0].mxu0 %v980
        %v1047 = vpop.f32.mrb[0].mxu0
        %v1048 = vadd.f32 %v920, %v1047
        %v1049 = vpop.f32.mrb[0].mxu0
        %v1050 = vpop.f32.mrb[0].mxu0
        %v1051 = vadd.f32 %v921, %v1050
        %v1052 = vpop.f32.mrb[0].mxu0
        %1053 = vmatprep.mubr.bf16.mxu0 0
        %1054 = vmatmul.mubr.bf16.gmra.mrb[0].mxu0 %v983
        %v1055 = vpop.f32.mrb[0].mxu0
        %v1056 = vadd.f32 %v922, %v1055
        %v1057 = vpop.f32.mrb[0].mxu0
        %v1058 = vpop.f32.mrb[0].mxu0
        %v1059 = vadd.f32 %v923, %v1058
        %v1060 = vpop.f32.mrb[0].mxu0
        %1061 = vmatprep.mubr.bf16.mxu0 0
        %1062 = vmatmul.mubr.bf16.gmra.mrb[0].mxu0 %v986
        %v1063 = vpop.f32.mrb[0].mxu0
        %v1064 = vadd.f32 %v924, %v1063
        %v1065 = vpop.f32.mrb[0].mxu0
        %v1066 = vpop.f32.mrb[0].mxu0
        %v1067 = vadd.f32 %v925, %v1066
        %v1068 = vpop.f32.mrb[0].mxu0
        %1069 = vmatprep.mubr.bf16.mxu0 0
        %1070 = vmatmul.mubr.bf16.gmra.mrb[0].mxu0 %v989
        %v1071 = vpop.f32.mrb[0].mxu0
        %v1072 = vadd.f32 %v926, %v1071
        %v1073 = vpop.f32.mrb[0].mxu0
        %v1074 = vpop.f32.mrb[0].mxu0
        %v1075 = vadd.f32 %v927, %v1074
        %v1076 = vpop.f32.mrb[0].mxu0
        %1077 = vmatprep.mubr.bf16.mxu0 0
        %1078 = vmatmul.mubr.bf16.gmra.mrb[0].mxu0 %v992
        %v1079 = vpop.f32.mrb[0].mxu0
        %v1080 = vadd.f32 %v928, %v1079
        %v1081 = vpop.f32.mrb[0].mxu0
        %v1082 = vpop.f32.mrb[0].mxu0
        %v1083 = vadd.f32 %v929, %v1082
        %v1084 = vpop.f32.mrb[0].mxu0
        %1085 = vmatprep.mubr.bf16.mxu0 0
        %1086 = vmatmul.mubr.bf16.gmra.mrb[0].mxu0 %v995
        %v1087 = vpop.f32.mrb[0].mxu0
        %v1088 = vadd.f32 %v930, %v1087
        %v1089 = vpop.f32.mrb[0].mxu0
        %v1090 = vpop.f32.mrb[0].mxu0
        %v1091 = vadd.f32 %v931, %v1090
        %v1092 = vpop.f32.mrb[0].mxu0
        %1093 = vdwg.mxu0
        %v1094 = vxor.u32 %v1032, 2147483648
        %v1095 = vxor.u32 %v1035, 2147483648
        %v1096 = vxor.u32 %v1040, 2147483648
        %v1097 = vxor.u32 %v1043, 2147483648
        %v1098 = vmul.f32 %v1094, 1.442695
        %v1099 = vpow.pop %v1098
        %v1100 = vmul.f32 %v1095, 1.442695
        %v1101 = vpow.pop %v1100
        %v1102 = vmul.f32 %v1096, 1.442695
        %v1103 = vpow.pop %v1102
        %v1104 = vmul.f32 %v1097, 1.442695
        %v1105 = vpow.pop %v1104
        %v1106 = vadd.f32 %v1099, 1.0
        %v1107 = vadd.f32 %v1101, 1.0
        %v1108 = vadd.f32 %v1103, 1.0
        %v1109 = vadd.f32 %v1105, 1.0
        %v1110 = vrcp.pop %v1106
        %v1111 = vmul.f32 1.0, %v1110
        %v1112 = vrcp.pop %v1107
        %v1113 = vmul.f32 1.0, %v1112
        %v1114 = vrcp.pop %v1108
        %v1115 = vmul.f32 1.0, %v1114
        %v1116 = vrcp.pop %v1109
        %v1117 = vmul.f32 1.0, %v1116
        %v1118 = vxor.u32 %v1048, 2147483648
        %v1119 = vxor.u32 %v1051, 2147483648
        %v1120 = vxor.u32 %v1056, 2147483648
        %v1121 = vxor.u32 %v1059, 2147483648
        %v1122 = vmul.f32 %v1118, 1.442695
        %v1123 = vpow.pop %v1122
        %v1124 = vmul.f32 %v1119, 1.442695
        %v1125 = vpow.pop %v1124
        %v1126 = vmul.f32 %v1120, 1.442695
        %v1127 = vpow.pop %v1126
        %v1128 = vmul.f32 %v1121, 1.442695
        %v1129 = vpow.pop %v1128
        %v1130 = vadd.f32 %v1123, 1.0
        %v1131 = vadd.f32 %v1125, 1.0
        %v1132 = vadd.f32 %v1127, 1.0
        %v1133 = vadd.f32 %v1129, 1.0
        %v1134 = vrcp.pop %v1130
        %v1135 = vmul.f32 1.0, %v1134
        %v1136 = vrcp.pop %v1131
        %v1137 = vmul.f32 1.0, %v1136
        %v1138 = vrcp.pop %v1132
        %v1139 = vmul.f32 1.0, %v1138
        %v1140 = vrcp.pop %v1133
        %v1141 = vmul.f32 1.0, %v1140
        %v1142 = vtanh.pop %v1064
        %v1143 = vtanh.pop %v1067
        %v1144 = vtanh.pop %v1072
        %v1145 = vtanh.pop %v1075
        %v1146 = vxor.u32 %v1080, 2147483648
        %v1147 = vxor.u32 %v1083, 2147483648
        %v1148 = vxor.u32 %v1088, 2147483648
        %v1149 = vxor.u32 %v1091, 2147483648
        %v1150 = vmul.f32 %v1146, 1.442695
        %v1151 = vpow.pop %v1150
        %v1152 = vmul.f32 %v1147, 1.442695
        %v1153 = vpow.pop %v1152
        %v1154 = vmul.f32 %v1148, 1.442695
        %v1155 = vpow.pop %v1154
        %v1156 = vmul.f32 %v1149, 1.442695
        %v1157 = vpow.pop %v1156
        %v1158 = vadd.f32 %v1151, 1.0
        %v1159 = vadd.f32 %v1153, 1.0
        %v1160 = vadd.f32 %v1155, 1.0
        %v1161 = vadd.f32 %v1157, 1.0
        %v1162 = vrcp.pop %v1158
        %v1163 = vmul.f32 1.0, %v1162
        %v1164 = vrcp.pop %v1159
        %v1165 = vmul.f32 1.0, %v1164
        %v1166 = vrcp.pop %v1160
        %v1167 = vmul.f32 1.0, %v1166
        %v1168 = vrcp.pop %v1161
        %v1169 = vmul.f32 1.0, %v1168
        %v1170 = vmul.f32 %v1135, %v902
        %v1171 = vmul.f32 %v1137, %v903
        %v1172 = vmul.f32 %v1139, %v904
        %v1173 = vmul.f32 %v1141, %v905
        %v1174 = vmul.f32 %v1111, %v1142
        %v1175 = vmul.f32 %v1113, %v1143
        %v1176 = vmul.f32 %v1115, %v1144
        %v1177 = vmul.f32 %v1117, %v1145
        %v1178 = vadd.f32 %v1170, %v1174
        %v1179 = vadd.f32 %v1171, %v1175
        %v1180 = vadd.f32 %v1172, %v1176
        %v1181 = vadd.f32 %v1173, %v1177
        %v1182 = vtanh.pop %v1178
        %v1183 = vtanh.pop %v1179
        %v1184 = vtanh.pop %v1180
        %v1185 = vtanh.pop %v1181
        %v1186 = vmul.f32 %v1163, %v1182
        %v1187 = vmul.f32 %v1165, %v1183
        %v1188 = vmul.f32 %v1167, %v1184
        %v1189 = vmul.f32 %v1169, %v1185
        %s1190 = smul.u32 %s25, 3
        %p1191 = scmp.lt.s32.totalorder %s1190, 8
        %s1192 = scalar_select %p1191, 1, 0
        %s1193 = scvt.s32.f32 %s1192
        %v1194 = vstv %s1193
        %v1195 = vmul.f32 %v1194, %v1186
        %v1196 = vmul.f32 %v1194, %v1187
        %v1197 = vmul.f32 %v1194, %v1188
        %v1198 = vmul.f32 %v1194, %v1189
        %s1199 = ssub.f32 1.0, %s1193
        %v1200 = vstv %s1199
        %v1201 = vmul.f32 %v1200, %v898
        %v1202 = vmul.f32 %v1200, %v899
        %v1203 = vmul.f32 %v1200, %v900
        %v1204 = vmul.f32 %v1200, %v901
        %v1205 = vadd.f32 %v1195, %v1201
        %v1206 = vadd.f32 %v1196, %v1202
        %v1207 = vadd.f32 %v1197, %v1203
        %v1208 = vadd.f32 %v1198, %v1204
        %v1209 = vmul.f32 %v1194, %v1178
        %v1210 = vmul.f32 %v1194, %v1179
        %v1211 = vmul.f32 %v1194, %v1180
        %v1212 = vmul.f32 %v1194, %v1181
        %v1213 = vmul.f32 %v1200, %v902
        %v1214 = vmul.f32 %v1200, %v903
        %v1215 = vmul.f32 %v1200, %v904
        %v1216 = vmul.f32 %v1200, %v905
        %v1217 = vadd.f32 %v1209, %v1213
        %v1218 = vadd.f32 %v1210, %v1214
        %v1219 = vadd.f32 %v1211, %v1215
        %v1220 = vadd.f32 %v1212, %v1216
        %v1221 = vpack.c.bf16 %v1206, %v1205
        %v1222 = vpack.c.bf16 %v1208, %v1207
        %v1223 = vld [vmem:[%s750] sm:$0xff]
        %v1224 = vld [vmem:[%s750 + $0x8] sm:$0xff]
        %v1225 = vld [vmem:[%s750 + $0x10] sm:$0xff]
        %v1226 = vld [vmem:[%s750 + $0x18] sm:$0xff]
        %v1227 = vld [vmem:[%s750 + $0x20] sm:$0xff]
        %v1228 = vld [vmem:[%s750 + $0x28] sm:$0xff]
        %v1229 = vld [vmem:[%s750 + $0x30] sm:$0xff]
        %v1230 = vld [vmem:[%s750 + $0x38] sm:$0xff]
        %v1231 = vunpack.c.l.bf16 %v1223
        %v1232 = vunpack.c.h.bf16 %v1223
        %v1233 = vunpack.c.l.bf16 %v1224
        %v1234 = vunpack.c.h.bf16 %v1224
        %v1235 = vunpack.c.l.bf16 %v1225
        %v1236 = vunpack.c.h.bf16 %v1225
        %v1237 = vunpack.c.l.bf16 %v1226
        %v1238 = vunpack.c.h.bf16 %v1226
        %v1239 = vunpack.c.l.bf16 %v1227
        %v1240 = vunpack.c.h.bf16 %v1227
        %v1241 = vunpack.c.l.bf16 %v1228
        %v1242 = vunpack.c.h.bf16 %v1228
        %v1243 = vunpack.c.l.bf16 %v1229
        %v1244 = vunpack.c.h.bf16 %v1229
        %v1245 = vunpack.c.l.bf16 %v1230
        %v1246 = vunpack.c.h.bf16 %v1230
        %1247 = vmatprep.subr.bf16.mxu0 0
        %1248 = vmatpush1.bf16.msra.mxu0 %v1221
        %1249 = vmatprep.subr.bf16.mxu0 0
        %1250 = vmatpush1.bf16.msra.mxu0 %v1222
        %1251 = vmatprep.subr.bf16.mxu0 0
        %1252 = vmatpush1.bf16.msra.mxu0 0
        %1253 = vmatprep.subr.bf16.mxu0 0
        %1254 = vmatpush1.bf16.msra.mxu0 0
        %1255 = vmatprep.subr.bf16.mxu0 0
        %1256 = vmatpush1.bf16.msra.mxu0 0
        %1257 = vmatprep.subr.bf16.mxu0 0
        %1258 = vmatpush1.bf16.msra.mxu0 0
        %1259 = vmatprep.subr.bf16.mxu0 0
        %1260 = vmatpush1.bf16.msra.mxu0 0
        %1261 = vmatprep.subr.bf16.mxu0 0
        %1262 = vmatpush1.bf16.msra.mxu0 0
        %1263 = vmatprep.subr.bf16.mxu0 0
        %1264 = vmatpush1.bf16.msra.mxu0 0
        %1265 = vmatprep.subr.bf16.mxu0 0
        %1266 = vmatpush1.bf16.msra.mxu0 0
        %1267 = vmatprep.subr.bf16.mxu0 0
        %1268 = vmatpush1.bf16.msra.mxu0 0
        %1269 = vmatprep.subr.bf16.mxu0 0
        %1270 = vmatpush1.bf16.msra.mxu0 0
        %1271 = vmatprep.subr.bf16.mxu0 0
        %1272 = vmatpush1.bf16.msra.mxu0 0
        %1273 = vmatprep.subr.bf16.mxu0 0
        %1274 = vmatpush1.bf16.msra.mxu0 0
        %1275 = vmatprep.subr.bf16.mxu0 0
        %1276 = vmatpush1.bf16.msra.mxu0 0
        %1277 = vmatprep.subr.bf16.mxu0 0
        %1278 = vmatpush1.bf16.msra.mxu0 0
        %1279 = vmatprep.mubr.bf16.mxu0 0
        %1280 = vmatmul.mubr.bf16.gmra.mrb[0].mxu0 %v974
        %v1281 = vpop.f32.mrb[0].mxu0
        %v1282 = vadd.f32 %v1231, %v1281
        %v1283 = vpop.f32.mrb[0].mxu0
        %v1284 = vpop.f32.mrb[0].mxu0
        %v1285 = vadd.f32 %v1232, %v1284
        %v1286 = vpop.f32.mrb[0].mxu0
        %1287 = vmatprep.mubr.bf16.mxu0 0
        %1288 = vmatmul.mubr.bf16.gmra.mrb[0].mxu0 %v977
        %v1289 = vpop.f32.mrb[0].mxu0
        %v1290 = vadd.f32 %v1233, %v1289
        %v1291 = vpop.f32.mrb[0].mxu0
        %v1292 = vpop.f32.mrb[0].mxu0
        %v1293 = vadd.f32 %v1234, %v1292
        %v1294 = vpop.f32.mrb[0].mxu0
        %1295 = vmatprep.mubr.bf16.mxu0 0
        %1296 = vmatmul.mubr.bf16.gmra.mrb[0].mxu0 %v980
        %v1297 = vpop.f32.mrb[0].mxu0
        %v1298 = vadd.f32 %v1235, %v1297
        %v1299 = vpop.f32.mrb[0].mxu0
        %v1300 = vpop.f32.mrb[0].mxu0
        %v1301 = vadd.f32 %v1236, %v1300
        %v1302 = vpop.f32.mrb[0].mxu0
        %1303 = vmatprep.mubr.bf16.mxu0 0
        %1304 = vmatmul.mubr.bf16.gmra.mrb[0].mxu0 %v983
        %v1305 = vpop.f32.mrb[0].mxu0
        %v1306 = vadd.f32 %v1237, %v1305
        %v1307 = vpop.f32.mrb[0].mxu0
        %v1308 = vpop.f32.mrb[0].mxu0
        %v1309 = vadd.f32 %v1238, %v1308
        %v1310 = vpop.f32.mrb[0].mxu0
        %1311 = vmatprep.mubr.bf16.mxu0 0
        %1312 = vmatmul.mubr.bf16.gmra.mrb[0].mxu0 %v986
        %v1313 = vpop.f32.mrb[0].mxu0
        %v1314 = vadd.f32 %v1239, %v1313
        %v1315 = vpop.f32.mrb[0].mxu0
        %v1316 = vpop.f32.mrb[0].mxu0
        %v1317 = vadd.f32 %v1240, %v1316
        %v1318 = vpop.f32.mrb[0].mxu0
        %1319 = vmatprep.mubr.bf16.mxu0 0
        %1320 = vmatmul.mubr.bf16.gmra.mrb[0].mxu0 %v989
        %v1321 = vpop.f32.mrb[0].mxu0
        %v1322 = vadd.f32 %v1241, %v1321
        %v1323 = vpop.f32.mrb[0].mxu0
        %v1324 = vpop.f32.mrb[0].mxu0
        %v1325 = vadd.f32 %v1242, %v1324
        %v1326 = vpop.f32.mrb[0].mxu0
        %1327 = vmatprep.mubr.bf16.mxu0 0
        %1328 = vmatmul.mubr.bf16.gmra.mrb[0].mxu0 %v992
        %v1329 = vpop.f32.mrb[0].mxu0
        %v1330 = vadd.f32 %v1243, %v1329
        %v1331 = vpop.f32.mrb[0].mxu0
        %v1332 = vpop.f32.mrb[0].mxu0
        %v1333 = vadd.f32 %v1244, %v1332
        %v1334 = vpop.f32.mrb[0].mxu0
        %1335 = vmatprep.mubr.bf16.mxu0 0
        %1336 = vmatmul.mubr.bf16.gmra.mrb[0].mxu0 %v995
        %v1337 = vpop.f32.mrb[0].mxu0
        %v1338 = vadd.f32 %v1245, %v1337
        %v1339 = vpop.f32.mrb[0].mxu0
        %v1340 = vpop.f32.mrb[0].mxu0
        %v1341 = vadd.f32 %v1246, %v1340
        %v1342 = vpop.f32.mrb[0].mxu0
        %1343 = vdwg.mxu0
        %v1344 = vxor.u32 %v1282, 2147483648
        %v1345 = vxor.u32 %v1285, 2147483648
        %v1346 = vxor.u32 %v1290, 2147483648
        %v1347 = vxor.u32 %v1293, 2147483648
        %v1348 = vmul.f32 %v1344, 1.442695
        %v1349 = vpow.pop %v1348
        %v1350 = vmul.f32 %v1345, 1.442695
        %v1351 = vpow.pop %v1350
        %v1352 = vmul.f32 %v1346, 1.442695
        %v1353 = vpow.pop %v1352
        %v1354 = vmul.f32 %v1347, 1.442695
        %v1355 = vpow.pop %v1354
        %v1356 = vadd.f32 %v1349, 1.0
        %v1357 = vadd.f32 %v1351, 1.0
        %v1358 = vadd.f32 %v1353, 1.0
        %v1359 = vadd.f32 %v1355, 1.0
        %v1360 = vrcp.pop %v1356
        %v1361 = vmul.f32 1.0, %v1360
        %v1362 = vrcp.pop %v1357
        %v1363 = vmul.f32 1.0, %v1362
        %v1364 = vrcp.pop %v1358
        %v1365 = vmul.f32 1.0, %v1364
        %v1366 = vrcp.pop %v1359
        %v1367 = vmul.f32 1.0, %v1366
        %v1368 = vxor.u32 %v1298, 2147483648
        %v1369 = vxor.u32 %v1301, 2147483648
        %v1370 = vxor.u32 %v1306, 2147483648
        %v1371 = vxor.u32 %v1309, 2147483648
        %v1372 = vmul.f32 %v1368, 1.442695
        %v1373 = vpow.pop %v1372
        %v1374 = vmul.f32 %v1369, 1.442695
        %v1375 = vpow.pop %v1374
        %v1376 = vmul.f32 %v1370, 1.442695
        %v1377 = vpow.pop %v1376
        %v1378 = vmul.f32 %v1371, 1.442695
        %v1379 = vpow.pop %v1378
        %v1380 = vadd.f32 %v1373, 1.0
        %v1381 = vadd.f32 %v1375, 1.0
        %v1382 = vadd.f32 %v1377, 1.0
        %v1383 = vadd.f32 %v1379, 1.0
        %v1384 = vrcp.pop %v1380
        %v1385 = vmul.f32 1.0, %v1384
        %v1386 = vrcp.pop %v1381
        %v1387 = vmul.f32 1.0, %v1386
        %v1388 = vrcp.pop %v1382
        %v1389 = vmul.f32 1.0, %v1388
        %v1390 = vrcp.pop %v1383
        %v1391 = vmul.f32 1.0, %v1390
        %v1392 = vtanh.pop %v1314
        %v1393 = vtanh.pop %v1317
        %v1394 = vtanh.pop %v1322
        %v1395 = vtanh.pop %v1325
        %v1396 = vxor.u32 %v1330, 2147483648
        %v1397 = vxor.u32 %v1333, 2147483648
        %v1398 = vxor.u32 %v1338, 2147483648
        %v1399 = vxor.u32 %v1341, 2147483648
        %v1400 = vmul.f32 %v1396, 1.442695
        %v1401 = vpow.pop %v1400
        %v1402 = vmul.f32 %v1397, 1.442695
        %v1403 = vpow.pop %v1402
        %v1404 = vmul.f32 %v1398, 1.442695
        %v1405 = vpow.pop %v1404
        %v1406 = vmul.f32 %v1399, 1.442695
        %v1407 = vpow.pop %v1406
        %v1408 = vadd.f32 %v1401, 1.0
        %v1409 = vadd.f32 %v1403, 1.0
        %v1410 = vadd.f32 %v1405, 1.0
        %v1411 = vadd.f32 %v1407, 1.0
        %v1412 = vrcp.pop %v1408
        %v1413 = vmul.f32 1.0, %v1412
        %v1414 = vrcp.pop %v1409
        %v1415 = vmul.f32 1.0, %v1414
        %v1416 = vrcp.pop %v1410
        %v1417 = vmul.f32 1.0, %v1416
        %v1418 = vrcp.pop %v1411
        %v1419 = vmul.f32 1.0, %v1418
        %v1420 = vmul.f32 %v1385, %v1217
        %v1421 = vmul.f32 %v1387, %v1218
        %v1422 = vmul.f32 %v1389, %v1219
        %v1423 = vmul.f32 %v1391, %v1220
        %v1424 = vmul.f32 %v1361, %v1392
        %v1425 = vmul.f32 %v1363, %v1393
        %v1426 = vmul.f32 %v1365, %v1394
        %v1427 = vmul.f32 %v1367, %v1395
        %v1428 = vadd.f32 %v1420, %v1424
        %v1429 = vadd.f32 %v1421, %v1425
        %v1430 = vadd.f32 %v1422, %v1426
        %v1431 = vadd.f32 %v1423, %v1427
        %v1432 = vtanh.pop %v1428
        %v1433 = vtanh.pop %v1429
        %v1434 = vtanh.pop %v1430
        %v1435 = vtanh.pop %v1431
        %v1436 = vmul.f32 %v1413, %v1432
        %v1437 = vmul.f32 %v1415, %v1433
        %v1438 = vmul.f32 %v1417, %v1434
        %v1439 = vmul.f32 %v1419, %v1435
        %s1440 = sadd.s32 %s1190, 1
        %p1441 = scmp.lt.s32.totalorder %s1440, 8
        %s1442 = scalar_select %p1441, 1, 0
        %s1443 = scvt.s32.f32 %s1442
        %v1444 = vstv %s1443
        %v1445 = vmul.f32 %v1444, %v1436
        %v1446 = vmul.f32 %v1444, %v1437
        %v1447 = vmul.f32 %v1444, %v1438
        %v1448 = vmul.f32 %v1444, %v1439
        %s1449 = ssub.f32 1.0, %s1443
        %v1450 = vstv %s1449
        %v1451 = vmul.f32 %v1450, %v1205
        %v1452 = vmul.f32 %v1450, %v1206
        %v1453 = vmul.f32 %v1450, %v1207
        %v1454 = vmul.f32 %v1450, %v1208
        %v1455 = vadd.f32 %v1445, %v1451
        %v1456 = vadd.f32 %v1446, %v1452
        %v1457 = vadd.f32 %v1447, %v1453
        %v1458 = vadd.f32 %v1448, %v1454
        %v1459 = vmul.f32 %v1444, %v1428
        %v1460 = vmul.f32 %v1444, %v1429
        %v1461 = vmul.f32 %v1444, %v1430
        %v1462 = vmul.f32 %v1444, %v1431
        %v1463 = vmul.f32 %v1450, %v1217
        %v1464 = vmul.f32 %v1450, %v1218
        %v1465 = vmul.f32 %v1450, %v1219
        %v1466 = vmul.f32 %v1450, %v1220
        %v1467 = vadd.f32 %v1459, %v1463
        %v1468 = vadd.f32 %v1460, %v1464
        %v1469 = vadd.f32 %v1461, %v1465
        %v1470 = vadd.f32 %v1462, %v1466
        %v1471 = vpack.c.bf16 %v1456, %v1455
        %v1472 = vpack.c.bf16 %v1458, %v1457
        %v1473 = vld [vmem:[%s873] sm:$0xff]
        %v1474 = vld [vmem:[%s873 + $0x8] sm:$0xff]
        %v1475 = vld [vmem:[%s873 + $0x10] sm:$0xff]
        %v1476 = vld [vmem:[%s873 + $0x18] sm:$0xff]
        %v1477 = vld [vmem:[%s873 + $0x20] sm:$0xff]
        %v1478 = vld [vmem:[%s873 + $0x28] sm:$0xff]
        %v1479 = vld [vmem:[%s873 + $0x30] sm:$0xff]
        %v1480 = vld [vmem:[%s873 + $0x38] sm:$0xff]
        %v1481 = vunpack.c.l.bf16 %v1473
        %v1482 = vunpack.c.h.bf16 %v1473
        %v1483 = vunpack.c.l.bf16 %v1474
        %v1484 = vunpack.c.h.bf16 %v1474
        %v1485 = vunpack.c.l.bf16 %v1475
        %v1486 = vunpack.c.h.bf16 %v1475
        %v1487 = vunpack.c.l.bf16 %v1476
        %v1488 = vunpack.c.h.bf16 %v1476
        %v1489 = vunpack.c.l.bf16 %v1477
        %v1490 = vunpack.c.h.bf16 %v1477
        %v1491 = vunpack.c.l.bf16 %v1478
        %v1492 = vunpack.c.h.bf16 %v1478
        %v1493 = vunpack.c.l.bf16 %v1479
        %v1494 = vunpack.c.h.bf16 %v1479
        %v1495 = vunpack.c.l.bf16 %v1480
        %v1496 = vunpack.c.h.bf16 %v1480
        %1497 = vmatprep.subr.bf16.mxu0 0
        %1498 = vmatpush1.bf16.msra.mxu0 %v1471
        %1499 = vmatprep.subr.bf16.mxu0 0
        %1500 = vmatpush1.bf16.msra.mxu0 %v1472
        %1501 = vmatprep.subr.bf16.mxu0 0
        %1502 = vmatpush1.bf16.msra.mxu0 0
        %1503 = vmatprep.subr.bf16.mxu0 0
        %1504 = vmatpush1.bf16.msra.mxu0 0
        %1505 = vmatprep.subr.bf16.mxu0 0
        %1506 = vmatpush1.bf16.msra.mxu0 0
        %1507 = vmatprep.subr.bf16.mxu0 0
        %1508 = vmatpush1.bf16.msra.mxu0 0
        %1509 = vmatprep.subr.bf16.mxu0 0
        %1510 = vmatpush1.bf16.msra.mxu0 0
        %1511 = vmatprep.subr.bf16.mxu0 0
        %1512 = vmatpush1.bf16.msra.mxu0 0
        %1513 = vmatprep.subr.bf16.mxu0 0
        %1514 = vmatpush1.bf16.msra.mxu0 0
        %1515 = vmatprep.subr.bf16.mxu0 0
        %1516 = vmatpush1.bf16.msra.mxu0 0
        %1517 = vmatprep.subr.bf16.mxu0 0
        %1518 = vmatpush1.bf16.msra.mxu0 0
        %1519 = vmatprep.subr.bf16.mxu0 0
        %1520 = vmatpush1.bf16.msra.mxu0 0
        %1521 = vmatprep.subr.bf16.mxu0 0
        %1522 = vmatpush1.bf16.msra.mxu0 0
        %1523 = vmatprep.subr.bf16.mxu0 0
        %1524 = vmatpush1.bf16.msra.mxu0 0
        %1525 = vmatprep.subr.bf16.mxu0 0
        %1526 = vmatpush1.bf16.msra.mxu0 0
        %1527 = vmatprep.subr.bf16.mxu0 0
        %1528 = vmatpush1.bf16.msra.mxu0 0
        %1529 = vmatprep.mubr.bf16.mxu0 0
        %1530 = vmatmul.mubr.bf16.gmra.mrb[0].mxu0 %v974
        %v1531 = vpop.f32.mrb[0].mxu0
        %v1532 = vadd.f32 %v1481, %v1531
        %v1533 = vpop.f32.mrb[0].mxu0
        %v1534 = vpop.f32.mrb[0].mxu0
        %v1535 = vadd.f32 %v1482, %v1534
        %v1536 = vpop.f32.mrb[0].mxu0
        %1537 = vmatprep.mubr.bf16.mxu0 0
        %1538 = vmatmul.mubr.bf16.gmra.mrb[0].mxu0 %v977
        %v1539 = vpop.f32.mrb[0].mxu0
        %v1540 = vadd.f32 %v1483, %v1539
        %v1541 = vpop.f32.mrb[0].mxu0
        %v1542 = vpop.f32.mrb[0].mxu0
        %v1543 = vadd.f32 %v1484, %v1542
        %v1544 = vpop.f32.mrb[0].mxu0
        %1545 = vmatprep.mubr.bf16.mxu0 0
        %1546 = vmatmul.mubr.bf16.gmra.mrb[0].mxu0 %v980
        %v1547 = vpop.f32.mrb[0].mxu0
        %v1548 = vadd.f32 %v1485, %v1547
        %v1549 = vpop.f32.mrb[0].mxu0
        %v1550 = vpop.f32.mrb[0].mxu0
        %v1551 = vadd.f32 %v1486, %v1550
        %v1552 = vpop.f32.mrb[0].mxu0
        %1553 = vmatprep.mubr.bf16.mxu0 0
        %1554 = vmatmul.mubr.bf16.gmra.mrb[0].mxu0 %v983
        %v1555 = vpop.f32.mrb[0].mxu0
        %v1556 = vadd.f32 %v1487, %v1555
        %v1557 = vpop.f32.mrb[0].mxu0
        %v1558 = vpop.f32.mrb[0].mxu0
        %v1559 = vadd.f32 %v1488, %v1558
        %v1560 = vpop.f32.mrb[0].mxu0
        %1561 = vmatprep.mubr.bf16.mxu0 0
        %1562 = vmatmul.mubr.bf16.gmra.mrb[0].mxu0 %v986
        %v1563 = vpop.f32.mrb[0].mxu0
        %v1564 = vadd.f32 %v1489, %v1563
        %v1565 = vpop.f32.mrb[0].mxu0
        %v1566 = vpop.f32.mrb[0].mxu0
        %v1567 = vadd.f32 %v1490, %v1566
        %v1568 = vpop.f32.mrb[0].mxu0
        %1569 = vmatprep.mubr.bf16.mxu0 0
        %1570 = vmatmul.mubr.bf16.gmra.mrb[0].mxu0 %v989
        %v1571 = vpop.f32.mrb[0].mxu0
        %v1572 = vadd.f32 %v1491, %v1571
        %v1573 = vpop.f32.mrb[0].mxu0
        %v1574 = vpop.f32.mrb[0].mxu0
        %v1575 = vadd.f32 %v1492, %v1574
        %v1576 = vpop.f32.mrb[0].mxu0
        %1577 = vmatprep.mubr.bf16.mxu0 0
        %1578 = vmatmul.mubr.bf16.gmra.mrb[0].mxu0 %v992
        %v1579 = vpop.f32.mrb[0].mxu0
        %v1580 = vadd.f32 %v1493, %v1579
        %v1581 = vpop.f32.mrb[0].mxu0
        %v1582 = vpop.f32.mrb[0].mxu0
        %v1583 = vadd.f32 %v1494, %v1582
        %v1584 = vpop.f32.mrb[0].mxu0
        %1585 = vmatprep.mubr.bf16.mxu0 0
        %1586 = vmatmul.mubr.bf16.gmra.mrb[0].mxu0 %v995
        %v1587 = vpop.f32.mrb[0].mxu0
        %v1588 = vadd.f32 %v1495, %v1587
        %v1589 = vpop.f32.mrb[0].mxu0
        %v1590 = vpop.f32.mrb[0].mxu0
        %v1591 = vadd.f32 %v1496, %v1590
        %v1592 = vpop.f32.mrb[0].mxu0
        %1593 = vdwg.mxu0
        %v1594 = vxor.u32 %v1532, 2147483648
        %v1595 = vxor.u32 %v1535, 2147483648
        %v1596 = vxor.u32 %v1540, 2147483648
        %v1597 = vxor.u32 %v1543, 2147483648
        %v1598 = vmul.f32 %v1594, 1.442695
        %v1599 = vpow.pop %v1598
        %v1600 = vmul.f32 %v1595, 1.442695
        %v1601 = vpow.pop %v1600
        %v1602 = vmul.f32 %v1596, 1.442695
        %v1603 = vpow.pop %v1602
        %v1604 = vmul.f32 %v1597, 1.442695
        %v1605 = vpow.pop %v1604
        %v1606 = vadd.f32 %v1599, 1.0
        %v1607 = vadd.f32 %v1601, 1.0
        %v1608 = vadd.f32 %v1603, 1.0
        %v1609 = vadd.f32 %v1605, 1.0
        %v1610 = vrcp.pop %v1606
        %v1611 = vmul.f32 1.0, %v1610
        %v1612 = vrcp.pop %v1607
        %v1613 = vmul.f32 1.0, %v1612
        %v1614 = vrcp.pop %v1608
        %v1615 = vmul.f32 1.0, %v1614
        %v1616 = vrcp.pop %v1609
        %v1617 = vmul.f32 1.0, %v1616
        %v1618 = vxor.u32 %v1548, 2147483648
        %v1619 = vxor.u32 %v1551, 2147483648
        %v1620 = vxor.u32 %v1556, 2147483648
        %v1621 = vxor.u32 %v1559, 2147483648
        %v1622 = vmul.f32 %v1618, 1.442695
        %v1623 = vpow.pop %v1622
        %v1624 = vmul.f32 %v1619, 1.442695
        %v1625 = vpow.pop %v1624
        %v1626 = vmul.f32 %v1620, 1.442695
        %v1627 = vpow.pop %v1626
        %v1628 = vmul.f32 %v1621, 1.442695
        %v1629 = vpow.pop %v1628
        %v1630 = vadd.f32 %v1623, 1.0
        %v1631 = vadd.f32 %v1625, 1.0
        %v1632 = vadd.f32 %v1627, 1.0
        %v1633 = vadd.f32 %v1629, 1.0
        %v1634 = vrcp.pop %v1630
        %v1635 = vmul.f32 1.0, %v1634
        %v1636 = vrcp.pop %v1631
        %v1637 = vmul.f32 1.0, %v1636
        %v1638 = vrcp.pop %v1632
        %v1639 = vmul.f32 1.0, %v1638
        %v1640 = vrcp.pop %v1633
        %v1641 = vmul.f32 1.0, %v1640
        %v1642 = vtanh.pop %v1564
        %v1643 = vtanh.pop %v1567
        %v1644 = vtanh.pop %v1572
        %v1645 = vtanh.pop %v1575
        %v1646 = vxor.u32 %v1580, 2147483648
        %v1647 = vxor.u32 %v1583, 2147483648
        %v1648 = vxor.u32 %v1588, 2147483648
        %v1649 = vxor.u32 %v1591, 2147483648
        %v1650 = vmul.f32 %v1646, 1.442695
        %v1651 = vpow.pop %v1650
        %v1652 = vmul.f32 %v1647, 1.442695
        %v1653 = vpow.pop %v1652
        %v1654 = vmul.f32 %v1648, 1.442695
        %v1655 = vpow.pop %v1654
        %v1656 = vmul.f32 %v1649, 1.442695
        %v1657 = vpow.pop %v1656
        %v1658 = vadd.f32 %v1651, 1.0
        %v1659 = vadd.f32 %v1653, 1.0
        %v1660 = vadd.f32 %v1655, 1.0
        %v1661 = vadd.f32 %v1657, 1.0
        %v1662 = vrcp.pop %v1658
        %v1663 = vmul.f32 1.0, %v1662
        %v1664 = vrcp.pop %v1659
        %v1665 = vmul.f32 1.0, %v1664
        %v1666 = vrcp.pop %v1660
        %v1667 = vmul.f32 1.0, %v1666
        %v1668 = vrcp.pop %v1661
        %v1669 = vmul.f32 1.0, %v1668
        %v1670 = vmul.f32 %v1635, %v1467
        %v1671 = vmul.f32 %v1637, %v1468
        %v1672 = vmul.f32 %v1639, %v1469
        %v1673 = vmul.f32 %v1641, %v1470
        %v1674 = vmul.f32 %v1611, %v1642
        %v1675 = vmul.f32 %v1613, %v1643
        %v1676 = vmul.f32 %v1615, %v1644
        %v1677 = vmul.f32 %v1617, %v1645
        %v1678 = vadd.f32 %v1670, %v1674
        %v1679 = vadd.f32 %v1671, %v1675
        %v1680 = vadd.f32 %v1672, %v1676
        %v1681 = vadd.f32 %v1673, %v1677
        %v1682 = vtanh.pop %v1678
        %v1683 = vtanh.pop %v1679
        %v1684 = vtanh.pop %v1680
        %v1685 = vtanh.pop %v1681
        %v1686 = vmul.f32 %v1663, %v1682
        %v1687 = vmul.f32 %v1665, %v1683
        %v1688 = vmul.f32 %v1667, %v1684
        %v1689 = vmul.f32 %v1669, %v1685
        %s1690 = sadd.s32 %s1190, 2
        %p1691 = scmp.lt.s32.totalorder %s1690, 8
        %s1692 = scalar_select %p1691, 1, 0
        %s1693 = scvt.s32.f32 %s1692
        %v1694 = vstv %s1693
        %v1695 = vmul.f32 %v1694, %v1686
        %v1696 = vmul.f32 %v1694, %v1687
        %v1697 = vmul.f32 %v1694, %v1688
        %v1698 = vmul.f32 %v1694, %v1689
        %s1699 = ssub.f32 1.0, %s1693
        %v1700 = vstv %s1699
        %v1701 = vmul.f32 %v1700, %v1455
        %v1702 = vmul.f32 %v1700, %v1456
        %v1703 = vmul.f32 %v1700, %v1457
        %v1704 = vmul.f32 %v1700, %v1458
        %v1705 = vadd.f32 %v1695, %v1701
        %v1706 = vadd.f32 %v1696, %v1702
        %v1707 = vadd.f32 %v1697, %v1703
        %v1708 = vadd.f32 %v1698, %v1704
        %v1709 = vmul.f32 %v1694, %v1678
        %v1710 = vmul.f32 %v1694, %v1679
        %v1711 = vmul.f32 %v1694, %v1680
        %v1712 = vmul.f32 %v1694, %v1681
        %v1713 = vmul.f32 %v1700, %v1467
        %v1714 = vmul.f32 %v1700, %v1468
        %v1715 = vmul.f32 %v1700, %v1469
        %v1716 = vmul.f32 %v1700, %v1470
        %v1717 = vadd.f32 %v1709, %v1713
        %v1718 = vadd.f32 %v1710, %v1714
        %v1719 = vadd.f32 %v1711, %v1715
        %v1720 = vadd.f32 %v1712, %v1716
        %1721 = vst [vmem:[#allocation3] sm:$0xff] %v1705
        %1722 = vst [vmem:[#allocation3 + $0x8] sm:$0xff] %v1706
        %1723 = vst [vmem:[#allocation3 + $0x10] sm:$0xff] %v1707
        %1724 = vst [vmem:[#allocation3 + $0x18] sm:$0xff] %v1708
        %1725 = vst [vmem:[#allocation4] sm:$0xff] %v1717
        %1726 = vst [vmem:[#allocation4 + $0x8] sm:$0xff] %v1718
        %1727 = vst [vmem:[#allocation4 + $0x10] sm:$0xff] %v1719
        %1728 = vst [vmem:[#allocation4 + $0x18] sm:$0xff] %v1720
        %p1729 = scmp.eq.s32.totalorder %s25, 2
        // Predicated region
        $region57: #{tpu_custom_call.1} parent=51 // pred_check
          %p1730 = pneg %p1729
        $region58: #{tpu_custom_call.1} parent=51 // pred_check_branch
          %1732 = sbr.rel (%p1730) target = $region60
        $region59: #{tpu_custom_call.1} parent=51 // pred_region
          %v1733 = vld [vmem:[%s4] sm:$0xff]
          %v1734 = vld [vmem:[%s4 + $0x8] sm:$0xff]
          %v1735 = vld [vmem:[%s4 + $0x10] sm:$0xff]
          %v1736 = vld [vmem:[%s4 + $0x18] sm:$0xff]
          %v1737 = vld [vmem:[%s4 + $0x20] sm:$0xff]
          %v1738 = vld [vmem:[%s4 + $0x28] sm:$0xff]
          %v1739 = vld [vmem:[%s4 + $0x30] sm:$0xff]
          %v1740 = vld [vmem:[%s4 + $0x38] sm:$0xff]
          %v1741 = vld [vmem:[%s4 + $0x40] sm:$0xff]
          %v1742 = vld [vmem:[%s4 + $0x48] sm:$0xff]
          %v1743 = vld [vmem:[%s4 + $0x50] sm:$0xff]
          %v1744 = vld [vmem:[%s4 + $0x58] sm:$0xff]
          %v1745 = vld [vmem:[%s4 + $0x60] sm:$0xff]
          %v1746 = vld [vmem:[%s4 + $0x68] sm:$0xff]
          %v1747 = vld [vmem:[%s4 + $0x70] sm:$0xff]
          %v1748 = vld [vmem:[%s4 + $0x78] sm:$0xff]
          %v1749 = vld [vmem:[%s5] sm:$0xff]
          %v1750 = vld [vmem:[%s5 + $0x8] sm:$0xff]
          %v1751 = vld [vmem:[%s5 + $0x10] sm:$0xff]
          %v1752 = vld [vmem:[%s5 + $0x18] sm:$0xff]
          %v1753 = vld [vmem:[%s5 + $0x20] sm:$0xff]
          %v1754 = vld [vmem:[%s5 + $0x28] sm:$0xff]
          %v1755 = vld [vmem:[%s5 + $0x30] sm:$0xff]
          %v1756 = vld [vmem:[%s5 + $0x38] sm:$0xff]
          %v1757 = vld [vmem:[%s5 + $0x40] sm:$0xff]
          %v1758 = vld [vmem:[%s5 + $0x48] sm:$0xff]
          %v1759 = vld [vmem:[%s5 + $0x50] sm:$0xff]
          %v1760 = vld [vmem:[%s5 + $0x58] sm:$0xff]
          %v1761 = vld [vmem:[%s5 + $0x60] sm:$0xff]
          %v1762 = vld [vmem:[%s5 + $0x68] sm:$0xff]
          %v1763 = vld [vmem:[%s5 + $0x70] sm:$0xff]
          %v1764 = vld [vmem:[%s5 + $0x78] sm:$0xff]
          %1766 = vset.pattern.permute.xlu0 0
          %1767 = vperm.xlu0 %1766, %v1749
          %v1768 = vpop.permute.xlu0 %1767
          %1771 = vset.pattern.permute.xlu0 0
          %1772 = vperm.xlu0 %1771, %v1750
          %v1773 = vpop.permute.xlu0 %1772
          %1776 = vset.pattern.permute.xlu0 0
          %1777 = vperm.xlu0 %1776, %v1751
          %v1778 = vpop.permute.xlu0 %1777
          %1781 = vset.pattern.permute.xlu0 0
          %1782 = vperm.xlu0 %1781, %v1752
          %v1783 = vpop.permute.xlu0 %1782
          %1786 = vset.pattern.permute.xlu0 0
          %1787 = vperm.xlu0 %1786, %v1753
          %v1788 = vpop.permute.xlu0 %1787
          %1791 = vset.pattern.permute.xlu0 0
          %1792 = vperm.xlu0 %1791, %v1754
          %v1793 = vpop.permute.xlu0 %1792
          %1796 = vset.pattern.permute.xlu0 0
          %1797 = vperm.xlu0 %1796, %v1755
          %v1798 = vpop.permute.xlu0 %1797
          %1801 = vset.pattern.permute.xlu0 0
          %1802 = vperm.xlu0 %1801, %v1756
          %v1803 = vpop.permute.xlu0 %1802
          %1806 = vset.pattern.permute.xlu0 0
          %1807 = vperm.xlu0 %1806, %v1757
          %v1808 = vpop.permute.xlu0 %1807
          %1811 = vset.pattern.permute.xlu0 0
          %1812 = vperm.xlu0 %1811, %v1758
          %v1813 = vpop.permute.xlu0 %1812
          %1816 = vset.pattern.permute.xlu0 0
          %1817 = vperm.xlu0 %1816, %v1759
          %v1818 = vpop.permute.xlu0 %1817
          %1821 = vset.pattern.permute.xlu0 0
          %1822 = vperm.xlu0 %1821, %v1760
          %v1823 = vpop.permute.xlu0 %1822
          %1826 = vset.pattern.permute.xlu0 0
          %1827 = vperm.xlu0 %1826, %v1761
          %v1828 = vpop.permute.xlu0 %1827
          %1831 = vset.pattern.permute.xlu0 0
          %1832 = vperm.xlu0 %1831, %v1762
          %v1833 = vpop.permute.xlu0 %1832
          %1836 = vset.pattern.permute.xlu0 0
          %1837 = vperm.xlu0 %1836, %v1763
          %v1838 = vpop.permute.xlu0 %1837
          %1841 = vset.pattern.permute.xlu0 0
          %1842 = vperm.xlu0 %1841, %v1764
          %v1843 = vpop.permute.xlu0 %1842
          %v1846 = vsel %vm972, %v1733, 0
          %v1849 = vsel %vm972, %v1734, 0
          %v1852 = vsel %vm972, %v1735, 0
          %v1855 = vsel %vm972, %v1736, 0
          %v1858 = vsel %vm972, %v1737, 0
          %v1861 = vsel %vm972, %v1738, 0
          %v1864 = vsel %vm972, %v1739, 0
          %v1867 = vsel %vm972, %v1740, 0
          %v1870 = vsel %vm972, %v1741, 0
          %v1873 = vsel %vm972, %v1742, 0
          %v1876 = vsel %vm972, %v1743, 0
          %v1879 = vsel %vm972, %v1744, 0
          %v1882 = vsel %vm972, %v1745, 0
          %v1885 = vsel %vm972, %v1746, 0
          %v1888 = vsel %vm972, %v1747, 0
          %v1891 = vsel %vm972, %v1748, 0
          %1893 = vmatprep.subr.mxu0 0.0
          %1894 = vmatpush1.msra.mxu0 %v1705
          %1895 = vmatprep.subr.mxu0 0.0
          %1896 = vmatpush1.msra.mxu0 %v1706
          %1897 = vmatprep.subr.mxu0 0.0
          %1898 = vmatpush1.msra.mxu0 %v1707
          %1899 = vmatprep.subr.mxu0 0.0
          %1900 = vmatpush1.msra.mxu0 %v1708
          %1901 = vmatprep.subr.mxu0 0.0
          %1902 = vmatpush1.msra.mxu0 0.0
          %1903 = vmatprep.subr.mxu0 0.0
          %1904 = vmatpush1.msra.mxu0 0.0
          %1905 = vmatprep.subr.mxu0 0.0
          %1906 = vmatpush1.msra.mxu0 0.0
          %1907 = vmatprep.subr.mxu0 0.0
          %1908 = vmatpush1.msra.mxu0 0.0
          %1909 = vmatprep.subr.mxu0 0.0
          %1910 = vmatpush1.msra.mxu0 0.0
          %1911 = vmatprep.subr.mxu0 0.0
          %1912 = vmatpush1.msra.mxu0 0.0
          %1913 = vmatprep.subr.mxu0 0.0
          %1914 = vmatpush1.msra.mxu0 0.0
          %1915 = vmatprep.subr.mxu0 0.0
          %1916 = vmatpush1.msra.mxu0 0.0
          %1917 = vmatprep.subr.mxu0 0.0
          %1918 = vmatpush1.msra.mxu0 0.0
          %1919 = vmatprep.subr.mxu0 0.0
          %1920 = vmatpush1.msra.mxu0 0.0
          %1921 = vmatprep.subr.mxu0 0.0
          %1922 = vmatpush1.msra.mxu0 0.0
          %1923 = vmatprep.subr.mxu0 0.0
          %1924 = vmatpush1.msra.mxu0 0.0
          %1925 = vmatprep.subr.mxu0 0.0
          %1926 = vmatpush1.msra.mxu0 0.0
          %1927 = vmatprep.subr.mxu0 0.0
          %1928 = vmatpush1.msra.mxu0 0.0
          %1929 = vmatprep.subr.mxu0 0.0
          %1930 = vmatpush1.msra.mxu0 0.0
          %1931 = vmatprep.subr.mxu0 0.0
          %1932 = vmatpush1.msra.mxu0 0.0
          %1933 = vmatprep.subr.mxu0 0.0
          %1934 = vmatpush1.msra.mxu0 0.0
          %1935 = vmatprep.subr.mxu0 0.0
          %1936 = vmatpush1.msra.mxu0 0.0
          %1937 = vmatprep.subr.mxu0 0.0
          %1938 = vmatpush1.msra.mxu0 0.0
          %1939 = vmatprep.subr.mxu0 0.0
          %1940 = vmatpush1.msra.mxu0 0.0
          %1941 = vmatprep.subr.mxu0 0.0
          %1942 = vmatpush1.msra.mxu0 0.0
          %1943 = vmatprep.subr.mxu0 0.0
          %1944 = vmatpush1.msra.mxu0 0.0
          %1945 = vmatprep.subr.mxu0 0.0
          %1946 = vmatpush1.msra.mxu0 0.0
          %1947 = vmatprep.subr.mxu0 0.0
          %1948 = vmatpush1.msra.mxu0 0.0
          %1949 = vmatprep.subr.mxu0 0.0
          %1950 = vmatpush1.msra.mxu0 0.0
          %1951 = vmatprep.subr.mxu0 0.0
          %1952 = vmatpush1.msra.mxu0 0.0
          %1953 = vmatprep.subr.mxu0 0.0
          %1954 = vmatpush1.msra.mxu0 0.0
          %1955 = vmatprep.subr.mxu0 0.0
          %1956 = vmatpush1.msra.mxu0 0.0
          %1957 = vmatprep.mubr.f32.mxu0 0.0
          %1958 = vmatmul.mubr.f32.gmra.mrb[0].mxu0 %v1846
          %v1959 = vpop.f32.mrb[0].mxu0
          %v1960 = vadd.f32 %v1768, %v1959
          %v1961 = vpop.f32.mrb[0].mxu0
          %1962 = vmatprep.mubr.f32.mxu0 0.0
          %1963 = vmatmul.mubr.f32.gmra.mrb[0].mxu0 %v1849
          %v1964 = vpop.f32.mrb[0].mxu0
          %v1965 = vadd.f32 %v1773, %v1964
          %v1966 = vpop.f32.mrb[0].mxu0
          %1967 = vmatprep.mubr.f32.mxu0 0.0
          %1968 = vmatmul.mubr.f32.gmra.mrb[0].mxu0 %v1852
          %v1969 = vpop.f32.mrb[0].mxu0
          %v1970 = vadd.f32 %v1778, %v1969
          %v1971 = vpop.f32.mrb[0].mxu0
          %1972 = vmatprep.mubr.f32.mxu0 0.0
          %1973 = vmatmul.mubr.f32.gmra.mrb[0].mxu0 %v1855
          %v1974 = vpop.f32.mrb[0].mxu0
          %v1975 = vadd.f32 %v1783, %v1974
          %v1976 = vpop.f32.mrb[0].mxu0
          %1977 = vmatprep.mubr.f32.mxu0 0.0
          %1978 = vmatmul.mubr.f32.gmra.mrb[0].mxu0 %v1858
          %v1979 = vpop.f32.mrb[0].mxu0
          %v1980 = vadd.f32 %v1788, %v1979
          %v1981 = vpop.f32.mrb[0].mxu0
          %1982 = vmatprep.mubr.f32.mxu0 0.0
          %1983 = vmatmul.mubr.f32.gmra.mrb[0].mxu0 %v1861
          %v1984 = vpop.f32.mrb[0].mxu0
          %v1985 = vadd.f32 %v1793, %v1984
          %v1986 = vpop.f32.mrb[0].mxu0
          %1987 = vmatprep.mubr.f32.mxu0 0.0
          %1988 = vmatmul.mubr.f32.gmra.mrb[0].mxu0 %v1864
          %v1989 = vpop.f32.mrb[0].mxu0
          %v1990 = vadd.f32 %v1798, %v1989
          %v1991 = vpop.f32.mrb[0].mxu0
          %1992 = vmatprep.mubr.f32.mxu0 0.0
          %1993 = vmatmul.mubr.f32.gmra.mrb[0].mxu0 %v1867
          %v1994 = vpop.f32.mrb[0].mxu0
          %v1995 = vadd.f32 %v1803, %v1994
          %v1996 = vpop.f32.mrb[0].mxu0
          %1997 = vmatprep.mubr.f32.mxu0 0.0
          %1998 = vmatmul.mubr.f32.gmra.mrb[0].mxu0 %v1870
          %v1999 = vpop.f32.mrb[0].mxu0
          %v2000 = vadd.f32 %v1808, %v1999
          %v2001 = vpop.f32.mrb[0].mxu0
          %2002 = vmatprep.mubr.f32.mxu0 0.0
          %2003 = vmatmul.mubr.f32.gmra.mrb[0].mxu0 %v1873
          %v2004 = vpop.f32.mrb[0].mxu0
          %v2005 = vadd.f32 %v1813, %v2004
          %v2006 = vpop.f32.mrb[0].mxu0
          %2007 = vmatprep.mubr.f32.mxu0 0.0
          %2008 = vmatmul.mubr.f32.gmra.mrb[0].mxu0 %v1876
          %v2009 = vpop.f32.mrb[0].mxu0
          %v2010 = vadd.f32 %v1818, %v2009
          %v2011 = vpop.f32.mrb[0].mxu0
          %2012 = vmatprep.mubr.f32.mxu0 0.0
          %2013 = vmatmul.mubr.f32.gmra.mrb[0].mxu0 %v1879
          %v2014 = vpop.f32.mrb[0].mxu0
          %v2015 = vadd.f32 %v1823, %v2014
          %v2016 = vpop.f32.mrb[0].mxu0
          %2017 = vmatprep.mubr.f32.mxu0 0.0
          %2018 = vmatmul.mubr.f32.gmra.mrb[0].mxu0 %v1882
          %v2019 = vpop.f32.mrb[0].mxu0
          %v2020 = vadd.f32 %v1828, %v2019
          %v2021 = vpop.f32.mrb[0].mxu0
          %2022 = vmatprep.mubr.f32.mxu0 0.0
          %2023 = vmatmul.mubr.f32.gmra.mrb[0].mxu0 %v1885
          %v2024 = vpop.f32.mrb[0].mxu0
          %v2025 = vadd.f32 %v1833, %v2024
          %v2026 = vpop.f32.mrb[0].mxu0
          %2027 = vmatprep.mubr.f32.mxu0 0.0
          %2028 = vmatmul.mubr.f32.gmra.mrb[0].mxu0 %v1888
          %v2029 = vpop.f32.mrb[0].mxu0
          %v2030 = vadd.f32 %v1838, %v2029
          %v2031 = vpop.f32.mrb[0].mxu0
          %2032 = vmatprep.mubr.f32.mxu0 0.0
          %2033 = vmatmul.mubr.f32.gmra.mrb[0].mxu0 %v1891
          %v2034 = vpop.f32.mrb[0].mxu0
          %v2035 = vadd.f32 %v1843, %v2034
          %v2036 = vpop.f32.mrb[0].mxu0
          %2037 = vdwg.mxu0
          %v2038 = vmax.f32 %v1960, 0.0
          %v2039 = vmax.f32 %v1965, 0.0
          %v2040 = vmax.f32 %v1970, 0.0
          %v2041 = vmax.f32 %v1975, 0.0
          %v2042 = vmax.f32 %v1980, 0.0
          %v2043 = vmax.f32 %v1985, 0.0
          %v2044 = vmax.f32 %v1990, 0.0
          %v2045 = vmax.f32 %v1995, 0.0
          %v2046 = vmax.f32 %v2000, 0.0
          %v2047 = vmax.f32 %v2005, 0.0
          %v2048 = vmax.f32 %v2010, 0.0
          %v2049 = vmax.f32 %v2015, 0.0
          %v2050 = vmax.f32 %v2020, 0.0
          %v2051 = vmax.f32 %v2025, 0.0
          %v2052 = vmax.f32 %v2030, 0.0
          %v2053 = vmax.f32 %v2035, 0.0
          %v2054 = vld [vmem:[%s6] sm:$0xff]
          %v2055 = vld [vmem:[%s7] sm:$0xff]
          %2057 = vset.pattern.permute.xlu0 0
          %2058 = vperm.xlu0 %2057, %v2055
          %v2059 = vpop.permute.xlu0 %2058
          %2061 = vmatprep.subr.mxu0 0.0
          %2062 = vmatpush1.msra.mxu0 %v2038
          %2063 = vmatprep.subr.mxu0 0.0
          %2064 = vmatpush1.msra.mxu0 %v2039
          %2065 = vmatprep.subr.mxu0 0.0
          %2066 = vmatpush1.msra.mxu0 %v2040
          %2067 = vmatprep.subr.mxu0 0.0
          %2068 = vmatpush1.msra.mxu0 %v2041
          %2069 = vmatprep.subr.mxu0 0.0
          %2070 = vmatpush1.msra.mxu0 %v2042
          %2071 = vmatprep.subr.mxu0 0.0
          %2072 = vmatpush1.msra.mxu0 %v2043
          %2073 = vmatprep.subr.mxu0 0.0
          %2074 = vmatpush1.msra.mxu0 %v2044
          %2075 = vmatprep.subr.mxu0 0.0
          %2076 = vmatpush1.msra.mxu0 %v2045
          %2077 = vmatprep.subr.mxu0 0.0
          %2078 = vmatpush1.msra.mxu0 %v2046
          %2079 = vmatprep.subr.mxu0 0.0
          %2080 = vmatpush1.msra.mxu0 %v2047
          %2081 = vmatprep.subr.mxu0 0.0
          %2082 = vmatpush1.msra.mxu0 %v2048
          %2083 = vmatprep.subr.mxu0 0.0
          %2084 = vmatpush1.msra.mxu0 %v2049
          %2085 = vmatprep.subr.mxu0 0.0
          %2086 = vmatpush1.msra.mxu0 %v2050
          %2087 = vmatprep.subr.mxu0 0.0
          %2088 = vmatpush1.msra.mxu0 %v2051
          %2089 = vmatprep.subr.mxu0 0.0
          %2090 = vmatpush1.msra.mxu0 %v2052
          %2091 = vmatprep.subr.mxu0 0.0
          %2092 = vmatpush1.msra.mxu0 %v2053
          %2093 = vmatprep.subr.mxu0 0.0
          %2094 = vmatpush1.msra.mxu0 0.0
          %2095 = vmatprep.subr.mxu0 0.0
          %2096 = vmatpush1.msra.mxu0 0.0
          %2097 = vmatprep.subr.mxu0 0.0
          %2098 = vmatpush1.msra.mxu0 0.0
          %2099 = vmatprep.subr.mxu0 0.0
          %2100 = vmatpush1.msra.mxu0 0.0
          %2101 = vmatprep.subr.mxu0 0.0
          %2102 = vmatpush1.msra.mxu0 0.0
          %2103 = vmatprep.subr.mxu0 0.0
          %2104 = vmatpush1.msra.mxu0 0.0
          %2105 = vmatprep.subr.mxu0 0.0
          %2106 = vmatpush1.msra.mxu0 0.0
          %2107 = vmatprep.subr.mxu0 0.0
          %2108 = vmatpush1.msra.mxu0 0.0
          %2109 = vmatprep.subr.mxu0 0.0
          %2110 = vmatpush1.msra.mxu0 0.0
          %2111 = vmatprep.subr.mxu0 0.0
          %2112 = vmatpush1.msra.mxu0 0.0
          %2113 = vmatprep.subr.mxu0 0.0
          %2114 = vmatpush1.msra.mxu0 0.0
          %2115 = vmatprep.subr.mxu0 0.0
          %2116 = vmatpush1.msra.mxu0 0.0
          %2117 = vmatprep.subr.mxu0 0.0
          %2118 = vmatpush1.msra.mxu0 0.0
          %2119 = vmatprep.subr.mxu0 0.0
          %2120 = vmatpush1.msra.mxu0 0.0
          %2121 = vmatprep.subr.mxu0 0.0
          %2122 = vmatpush1.msra.mxu0 0.0
          %2123 = vmatprep.subr.mxu0 0.0
          %2124 = vmatpush1.msra.mxu0 0.0
          %2125 = vmatprep.mubr.f32.mxu0 0.0
          %2126 = vmatmul.mubr.f32.gmra.mrb[0].mxu0 %v2054
          %v2127 = vpop.f32.mrb[0].mxu0
          %v2128 = vadd.f32 %v2059, %v2127
          %v2129 = vpop.f32.mrb[0].mxu0
          %2130 = vdwg.mxu0
          %2131 = vst [vmem:[#allocation5] sm:$0xff] %v2128
        $region60: #{tpu_custom_call.1} parent=51 // pred_fallthru
          _
        // Predicated region
        $region61: #{tpu_custom_call.1} parent=51 // pred_check
          %p2132 = pneg %p225
        $region62: #{tpu_custom_call.1} parent=51 // pred_check_branch
          %2134 = sbr.rel (%p2132) target = $region64
        $region63: #{tpu_custom_call.1} parent=51 // pred_region
          %s2136 = ssub.s32 128, 128
          %2137 = vsyncadd [#allocation6], %s2136
          %s2138 = smul.addr %s24, 128
          %s2139 = scalar_lea.hbm %s8, %s2138
          %s2141 = sshll.u32 [#allocation5], 4
          %s2142 = int_to_ptr.vmem [resolvable:$true] %s2141
          %2144 = dma.vmem_to_hbm [thread:$0]  %s2142, 128, %s2139, [#allocation6]
        $region64: #{tpu_custom_call.1} parent=51 // pred_fallthru
          _
        // Predicated region
        $region65: #{tpu_custom_call.1} parent=51 // pred_check
          %p2145 = pneg %p225
        $region66: #{tpu_custom_call.1} parent=51 // pred_check_branch
          %2147 = sbr.rel (%p2145) target = $region68
        $region67: #{tpu_custom_call.1} parent=51 // pred_region
          %2148 = dma.done [#allocation6], 128
        $region68: #{tpu_custom_call.1} parent=51 // pred_fallthru
          _
      $region52: #{tpu_custom_call.1} parent=5 // pred_fallthru
        _
      %p2149 = scmp.le.s32.totalorder 2, %s15
      // Predicated region
      $region69: #{tpu_custom_call.1} parent=5 // pred_check
        %p2150 = pneg %p2149
      $region70: #{tpu_custom_call.1} parent=5 // pred_check_branch
        %2152 = sbr.rel (%p2150) target = $region72
      $region71: #{tpu_custom_call.1} parent=5 // pred_region
        %s2153 = ssub.s32 %s15, 2
      $region72: #{tpu_custom_call.1} parent=5 // pred_fallthru
        _
    $region6: #{tpu_custom_call.1} parent=1 // loop_footer
      %s19 = sadd.s32 1, %s15
    $region7: #{tpu_custom_call.1} parent=1 // loop_footer_branch
      %14 = sbr.rel target = $region3
    $region8: #{tpu_custom_call.1} parent=1 // loop_exit
      _
    %2154 = vsyncpa [#allocation6], 1
    %s2155 = scalar_lea.sflag [#allocation6], 1
    %2156 = vsyncpa %s2155, 1

</llo_original>
